<compile_context>
chip_gen: v7x
topology: tpu7x:2x2x1
jax: 0.10.0
libtpu: 0.0.40
codegen_flags: <defaults>
</compile_context>

<pallas_src>
import jax
import jax.numpy as jnp
from jax.experimental import pallas as pl
from jax.experimental.pallas import tpu as pltpu


def _round_up(x, m):
    return ((x + m - 1) // m) * m


def cfnet_kernel(
    u_ref, it_ref,
    w_u, w_i,                       # [384, 384] bf16 fused first-layer weights (cols 0:128 dmf, 128:384 mlp)
    b_udmf, b_idmf, b_mc1,          # [1,128], [1,128], [1,256] f32 fused biases
    w_du3, b_du3, w_di3, b_di3,     # [128,64] bf16 / [1,64] f32
    w_mc2, b_mc2, w_mc3, b_mc3,     # [256,128]/[1,128], [128,64]/[1,64]
    wf_dmf, wf_mlp, b_f,            # [1,64], [1,64], [1,1] f32 (fusion layer rows)
    out_ref,
):
    f32 = jnp.float32
    bf16 = jnp.bfloat16

    u = u_ref[...].astype(bf16)
    it = it_ref[...].astype(bf16)

    def mm(x, w_ref):
        return jnp.dot(x, w_ref[...], preferred_element_type=f32)

    # Fused first layers: one wide MXU matmul per input.
    hu = mm(u, w_u)                                   # [bt, 384] f32
    hi = mm(it, w_i)                                  # [bt, 384] f32

    # DMF towers (layer1∘layer2 pre-composed; ReLU applied here).
    du2 = jnp.maximum(hu[:, :128] + b_udmf[...], 0.0)
    di2 = jnp.maximum(hi[:, :128] + b_idmf[...], 0.0)
    # MLP concat layer1 (mlp_user/item ∘ concat_linear1 pre-composed).
    o1 = jnp.maximum(hu[:, 128:] + hi[:, 128:] + b_mc1[...], 0.0)

    du_lat = jnp.maximum(mm(du2.astype(bf16), w_du3) + b_du3[...], 0.0)   # [bt, 64]
    di_lat = jnp.maximum(mm(di2.astype(bf16), w_di3) + b_di3[...], 0.0)   # [bt, 64]
    dmf_vec = du_lat * di_lat                                             # [bt, 64]

    o2 = jnp.maximum(mm(o1.astype(bf16), w_mc2) + b_mc2[...], 0.0)        # [bt, 128]
    mlp_vec = jnp.maximum(mm(o2.astype(bf16), w_mc3) + b_mc3[...], 0.0)   # [bt, 64]

    # Fusion (128 -> 1) on the VPU + lane reduce instead of two N=1 MXU passes.
    z = dmf_vec * wf_dmf[...] + mlp_vec * wf_mlp[...]                     # [bt, 64]
    logits = jnp.sum(z, axis=-1, keepdims=True) + b_f[...]                # [bt, 1]
    out_ref[...] = jax.nn.sigmoid(logits).astype(out_ref.dtype)


def make_params(key):
    """Deterministic parameter init. Weights are [in, out]; biases are [1, out]."""
    shapes = {
        "dmf_user_1": (384, 256), "dmf_user_2": (256, 128), "dmf_user_3": (128, 64),
        "dmf_item_1": (384, 256), "dmf_item_2": (256, 128), "dmf_item_3": (128, 64),
        "mlp_user":   (384, 256), "mlp_item":   (384, 256),
        "mlp_cat_1":  (512, 256), "mlp_cat_2":  (256, 128), "mlp_cat_3":  (128, 64),
        "fusion":     (128, 1),
    }
    params = {}
    keys = jax.random.split(key, 2 * len(shapes))
    for i, (name, (fin, fout)) in enumerate(shapes.items()):
        kw, kb = keys[2 * i], keys[2 * i + 1]
        scale = 1.0 / jnp.sqrt(jnp.float32(fin))
        params[name + "_w"] = jax.random.uniform(
            kw, (fin, fout), jnp.float32, minval=-scale, maxval=scale)
        params[name + "_b"] = jax.random.uniform(
            kb, (1, fout), jnp.float32, minval=-scale, maxval=scale)
    return params


def _prep_kernel_args(params):
    """Host-side (exact) layer composition + bf16 weight conversion."""
    p = params
    f32 = jnp.float32
    bf16 = jnp.bfloat16

    # dmf_*_linear1 has no activation before linear2 -> exact composition.
    w_du12 = p["dmf_user_1_w"] @ p["dmf_user_2_w"]                          # [384,128]
    b_du12 = p["dmf_user_1_b"] @ p["dmf_user_2_w"] + p["dmf_user_2_b"]      # [1,128]
    w_di12 = p["dmf_item_1_w"] @ p["dmf_item_2_w"]
    b_di12 = p["dmf_item_1_b"] @ p["dmf_item_2_w"] + p["dmf_item_2_b"]

    # concat([mu, mi]) @ Wc1 == mu @ Wc1_top + mi @ Wc1_bot, and mu/mi are pure
    # linear outputs -> compose mlp_user/item into the concat layer.
    wc1_top = p["mlp_cat_1_w"][:256, :]
    wc1_bot = p["mlp_cat_1_w"][256:, :]
    w_mu_c1 = p["mlp_user_w"] @ wc1_top                                     # [384,256]
    w_mi_c1 = p["mlp_item_w"] @ wc1_bot                                     # [384,256]
    b_mc1 = (p["mlp_user_b"] @ wc1_top + p["mlp_item_b"] @ wc1_bot
             + p["mlp_cat_1_b"])                                            # [1,256]

    # Fuse the two matmuls sharing each input into one [384, 384] weight.
    w_u = jnp.concatenate([w_du12, w_mu_c1], axis=1).astype(bf16)
    w_i = jnp.concatenate([w_di12, w_mi_c1], axis=1).astype(bf16)

    # Fusion weights as broadcastable rows (kept f32 for the VPU path).
    wf_dmf = p["fusion_w"][:64, :].reshape(1, 64).astype(f32)
    wf_mlp = p["fusion_w"][64:, :].reshape(1, 64).astype(f32)

    return [
        w_u, w_i,
        b_du12.astype(f32), b_di12.astype(f32), b_mc1.astype(f32),
        p["dmf_user_3_w"].astype(bf16), p["dmf_user_3_b"],
        p["dmf_item_3_w"].astype(bf16), p["dmf_item_3_b"],
        p["mlp_cat_2_w"].astype(bf16), p["mlp_cat_2_b"],
        p["mlp_cat_3_w"].astype(bf16), p["mlp_cat_3_b"],
        wf_dmf, wf_mlp, p["fusion_b"],
    ]


def cfnet_forward(user_input, item_input, params, *, batch_tile=512):
    B = user_input.shape[0]
    # Use a large batch tile when B allows it; never smaller than 8 sublanes.
    bt = min(batch_tile, _round_up(B, 8))
    Bp = _round_up(B, bt)
    if Bp != B:
        pad = Bp - B
        user_input = jnp.pad(user_input, ((0, pad), (0, 0)))
        item_input = jnp.pad(item_input, ((0, pad), (0, 0)))

    weight_args = _prep_kernel_args(params)

    def full_spec(arr):
        # Whole (small) weight array resident in VMEM; same block every grid
        # step, so Pallas does not re-DMA it.
        return pl.BlockSpec(arr.shape, lambda b: (0, 0))

    in_specs = [
        pl.BlockSpec((bt, 384), lambda b: (b, 0)),   # user_input tile
        pl.BlockSpec((bt, 384), lambda b: (b, 0)),   # item_input tile
    ] + [full_spec(a) for a in weight_args]

    out_spec = pl.BlockSpec((bt, 1), lambda b: (b, 0))

    out = pl.pallas_call(
        cfnet_kernel,
        out_shape=jax.ShapeDtypeStruct((Bp, 1), jnp.float32),
        grid_spec=pltpu.PrefetchScalarGridSpec(
            num_scalar_prefetch=0,
            grid=(Bp // bt,),
            in_specs=in_specs,
            out_specs=out_spec,
        ),
        compiler_params=pltpu.CompilerParams(
            dimension_semantics=("parallel",),
            vmem_limit_bytes=32 * 1024 * 1024,
        ),
    )(user_input, item_input, *weight_args)
    return out[:B]


def cfnet_reference(user_input, item_input, params):
    """Pure-JAX f32 reference mirroring the PyTorch forward exactly."""
    p = params
    relu = jax.nn.relu

    def lin(x, name):
        return x @ p[name + "_w"] + p[name + "_b"]

    du1 = lin(user_input, "dmf_user_1")
    du2 = relu(lin(du1, "dmf_user_2"))
    du_latent = relu(lin(du2, "dmf_user_3"))
    di1 = lin(item_input, "dmf_item_1")
    di2 = relu(lin(di1, "dmf_item_2"))
    di_latent = relu(lin(di2, "dmf_item_3"))
    dmf_vec = du_latent * di_latent

    mu = lin(user_input, "mlp_user")
    mi = lin(item_input, "mlp_item")
    cat = jnp.concatenate([mu, mi], axis=1)
    o1 = relu(lin(cat, "mlp_cat_1"))
    o2 = relu(lin(o1, "mlp_cat_2"))
    mlp_vec = relu(lin(o2, "mlp_cat_3"))

    fusion = jnp.concatenate([dmf_vec, mlp_vec], axis=1)
    return jax.nn.sigmoid(lin(fusion, "fusion"))


if __name__ == "__main__":
    key = jax.random.PRNGKey(0)
    k_params, k_user, k_item = jax.random.split(key, 3)
    params = make_params(k_params)

    # Small demo batch (single tile).
    B = 8
    user_input = jax.random.normal(k_user, (B, 384), jnp.float32)
    item_input = jax.random.normal(k_item, (B, 384), jnp.float32)
    out = jax.block_until_ready(cfnet_forward(user_input, item_input, params))
    ref = cfnet_reference(user_input, item_input, params)
    assert out.shape == (B, 1)
    assert jnp.allclose(out, ref, atol=3e-2), float(jnp.max(jnp.abs(out - ref)))

    # Larger batch exercising the multi-tile path (grid > 1) and padding.
    B2 = 520  # not a multiple of the 512 batch tile -> exercises padding
    k_u2, k_i2 = jax.random.split(k_item, 2)
    u2 = jax.random.normal(k_u2, (B2, 384), jnp.float32)
    i2 = jax.random.normal(k_i2, (B2, 384), jnp.float32)
    out2 = jax.block_until_ready(cfnet_forward(u2, i2, params))
    ref2 = cfnet_reference(u2, i2, params)
    assert out2.shape == (B2, 1)
    assert jnp.allclose(out2, ref2, atol=3e-2), float(jnp.max(jnp.abs(out2 - ref2)))

    print("KERNEL_OK")
</pallas_src>

<mosaic_0001>
module attributes {stable_mosaic.version = 11 : i64} {
  func.func @cfnet_kernel(%arg0: i32, %arg1: memref<8x384xf32, #tpu.memory_space<vmem>>, %arg2: memref<8x384xf32, #tpu.memory_space<vmem>>, %arg3: memref<384x384xbf16, #tpu.memory_space<vmem>>, %arg4: memref<384x384xbf16, #tpu.memory_space<vmem>>, %arg5: memref<1x128xf32, #tpu.memory_space<vmem>>, %arg6: memref<1x128xf32, #tpu.memory_space<vmem>>, %arg7: memref<1x256xf32, #tpu.memory_space<vmem>>, %arg8: memref<128x64xbf16, #tpu.memory_space<vmem>>, %arg9: memref<1x64xf32, #tpu.memory_space<vmem>>, %arg10: memref<128x64xbf16, #tpu.memory_space<vmem>>, %arg11: memref<1x64xf32, #tpu.memory_space<vmem>>, %arg12: memref<256x128xbf16, #tpu.memory_space<vmem>>, %arg13: memref<1x128xf32, #tpu.memory_space<vmem>>, %arg14: memref<128x64xbf16, #tpu.memory_space<vmem>>, %arg15: memref<1x64xf32, #tpu.memory_space<vmem>>, %arg16: memref<1x64xf32, #tpu.memory_space<vmem>>, %arg17: memref<1x64xf32, #tpu.memory_space<vmem>>, %arg18: memref<1x1xf32, #tpu.memory_space<vmem>>, %arg19: memref<8x1xf32, #tpu.memory_space<vmem>>) attributes {dimension_semantics = [#tpu.dimension_semantics<parallel>], iteration_bounds = array<i64: 1>, scalar_prefetch = 0 : i64, scratch_operands = 0 : i64, tpu.core_type = #tpu.core_type<tc>, window_params = [{transform_indices = @transform_0, window_bounds = array<i64: 8, 384>}, {transform_indices = @transform_1, window_bounds = array<i64: 8, 384>}, {pipeline_mode = #tpu.pipeline_mode<synchronous>, transform_indices = @transform_2, window_bounds = array<i64: 384, 384>}, {pipeline_mode = #tpu.pipeline_mode<synchronous>, transform_indices = @transform_3, window_bounds = array<i64: 384, 384>}, {pipeline_mode = #tpu.pipeline_mode<synchronous>, transform_indices = @transform_4, window_bounds = array<i64: 1, 128>}, {pipeline_mode = #tpu.pipeline_mode<synchronous>, transform_indices = @transform_5, window_bounds = array<i64: 1, 128>}, {pipeline_mode = #tpu.pipeline_mode<synchronous>, transform_indices = @transform_6, window_bounds = array<i64: 1, 256>}, {pipeline_mode = #tpu.pipeline_mode<synchronous>, transform_indices = @transform_7, window_bounds = array<i64: 128, 64>}, {pipeline_mode = #tpu.pipeline_mode<synchronous>, transform_indices = @transform_8, window_bounds = array<i64: 1, 64>}, {pipeline_mode = #tpu.pipeline_mode<synchronous>, transform_indices = @transform_9, window_bounds = array<i64: 128, 64>}, {pipeline_mode = #tpu.pipeline_mode<synchronous>, transform_indices = @transform_10, window_bounds = array<i64: 1, 64>}, {pipeline_mode = #tpu.pipeline_mode<synchronous>, transform_indices = @transform_11, window_bounds = array<i64: 256, 128>}, {pipeline_mode = #tpu.pipeline_mode<synchronous>, transform_indices = @transform_12, window_bounds = array<i64: 1, 128>}, {pipeline_mode = #tpu.pipeline_mode<synchronous>, transform_indices = @transform_13, window_bounds = array<i64: 128, 64>}, {pipeline_mode = #tpu.pipeline_mode<synchronous>, transform_indices = @transform_14, window_bounds = array<i64: 1, 64>}, {pipeline_mode = #tpu.pipeline_mode<synchronous>, transform_indices = @transform_15, window_bounds = array<i64: 1, 64>}, {pipeline_mode = #tpu.pipeline_mode<synchronous>, transform_indices = @transform_16, window_bounds = array<i64: 1, 64>}, {pipeline_mode = #tpu.pipeline_mode<synchronous>, transform_indices = @transform_17, window_bounds = array<i64: 1, 1>}, {transform_indices = @transform_18, window_bounds = array<i64: 8, 1>}]} {
    %c0 = arith.constant 0 : index
    %c0_0 = arith.constant 0 : index
    %0 = vector.load %arg1[%c0, %c0_0] : memref<8x384xf32, #tpu.memory_space<vmem>>, vector<8x384xf32>
    %1 = arith.truncf %0 : vector<8x384xf32> to vector<8x384xbf16>
    %c0_1 = arith.constant 0 : index
    %c0_2 = arith.constant 0 : index
    %2 = vector.load %arg2[%c0_1, %c0_2] : memref<8x384xf32, #tpu.memory_space<vmem>>, vector<8x384xf32>
    %3 = arith.truncf %2 : vector<8x384xf32> to vector<8x384xbf16>
    %c0_3 = arith.constant 0 : index
    %c0_4 = arith.constant 0 : index
    %4 = vector.load %arg3[%c0_3, %c0_4] : memref<384x384xbf16, #tpu.memory_space<vmem>>, vector<384x384xbf16>
    %cst = arith.constant dense<0.000000e+00> : vector<8x384xf32>
    %5 = tpu.matmul %1, %4, %cst {dimension_numbers = #tpu.dot_dimension_numbers<[1], [0], [0], [1], [0, 0, 1, 1], [], []>} : vector<8x384xbf16>, vector<384x384xbf16>, vector<8x384xf32> -> vector<8x384xf32>
    %c0_5 = arith.constant 0 : index
    %c0_6 = arith.constant 0 : index
    %6 = vector.load %arg4[%c0_5, %c0_6] : memref<384x384xbf16, #tpu.memory_space<vmem>>, vector<384x384xbf16>
    %cst_7 = arith.constant dense<0.000000e+00> : vector<8x384xf32>
    %7 = tpu.matmul %3, %6, %cst_7 {dimension_numbers = #tpu.dot_dimension_numbers<[1], [0], [0], [1], [0, 0, 1, 1], [], []>} : vector<8x384xbf16>, vector<384x384xbf16>, vector<8x384xf32> -> vector<8x384xf32>
    %8 = vector.extract_strided_slice %5 {offsets = [0, 0], sizes = [8, 128], strides = [1, 1]} : vector<8x384xf32> to vector<8x128xf32>
    %c0_8 = arith.constant 0 : index
    %c0_9 = arith.constant 0 : index
    %9 = vector.load %arg5[%c0_8, %c0_9] : memref<1x128xf32, #tpu.memory_space<vmem>>, vector<1x128xf32>
    %10 = vector.broadcast %9 : vector<1x128xf32> to vector<8x128xf32>
    %11 = arith.addf %8, %10 : vector<8x128xf32>
    %cst_10 = arith.constant 0.000000e+00 : f32
    %12 = vector.broadcast %cst_10 : f32 to vector<8x128xf32>
    %13 = arith.maximumf %11, %12 : vector<8x128xf32>
    %14 = vector.extract_strided_slice %7 {offsets = [0, 0], sizes = [8, 128], strides = [1, 1]} : vector<8x384xf32> to vector<8x128xf32>
    %c0_11 = arith.constant 0 : index
    %c0_12 = arith.constant 0 : index
    %15 = vector.load %arg6[%c0_11, %c0_12] : memref<1x128xf32, #tpu.memory_space<vmem>>, vector<1x128xf32>
    %16 = vector.broadcast %15 : vector<1x128xf32> to vector<8x128xf32>
    %17 = arith.addf %14, %16 : vector<8x128xf32>
    %cst_13 = arith.constant 0.000000e+00 : f32
    %18 = vector.broadcast %cst_13 : f32 to vector<8x128xf32>
    %19 = arith.maximumf %17, %18 : vector<8x128xf32>
    %20 = vector.extract_strided_slice %5 {offsets = [0, 128], sizes = [8, 256], strides = [1, 1]} : vector<8x384xf32> to vector<8x256xf32>
    %21 = vector.extract_strided_slice %7 {offsets = [0, 128], sizes = [8, 256], strides = [1, 1]} : vector<8x384xf32> to vector<8x256xf32>
    %22 = arith.addf %20, %21 : vector<8x256xf32>
    %c0_14 = arith.constant 0 : index
    %c0_15 = arith.constant 0 : index
    %23 = vector.load %arg7[%c0_14, %c0_15] : memref<1x256xf32, #tpu.memory_space<vmem>>, vector<1x256xf32>
    %24 = vector.broadcast %23 : vector<1x256xf32> to vector<8x256xf32>
    %25 = arith.addf %22, %24 : vector<8x256xf32>
    %cst_16 = arith.constant 0.000000e+00 : f32
    %26 = vector.broadcast %cst_16 : f32 to vector<8x256xf32>
    %27 = arith.maximumf %25, %26 : vector<8x256xf32>
    %28 = arith.truncf %13 : vector<8x128xf32> to vector<8x128xbf16>
    %c0_17 = arith.constant 0 : index
    %c0_18 = arith.constant 0 : index
    %29 = vector.load %arg8[%c0_17, %c0_18] : memref<128x64xbf16, #tpu.memory_space<vmem>>, vector<128x64xbf16>
    %cst_19 = arith.constant dense<0.000000e+00> : vector<8x64xf32>
    %30 = tpu.matmul %28, %29, %cst_19 {dimension_numbers = #tpu.dot_dimension_numbers<[1], [0], [0], [1], [0, 0, 1, 1], [], []>} : vector<8x128xbf16>, vector<128x64xbf16>, vector<8x64xf32> -> vector<8x64xf32>
    %c0_20 = arith.constant 0 : index
    %c0_21 = arith.constant 0 : index
    %31 = vector.load %arg9[%c0_20, %c0_21] : memref<1x64xf32, #tpu.memory_space<vmem>>, vector<1x64xf32>
    %32 = vector.broadcast %31 : vector<1x64xf32> to vector<8x64xf32>
    %33 = arith.addf %30, %32 : vector<8x64xf32>
    %cst_22 = arith.constant 0.000000e+00 : f32
    %34 = vector.broadcast %cst_22 : f32 to vector<8x64xf32>
    %35 = arith.maximumf %33, %34 : vector<8x64xf32>
    %36 = arith.truncf %19 : vector<8x128xf32> to vector<8x128xbf16>
    %c0_23 = arith.constant 0 : index
    %c0_24 = arith.constant 0 : index
    %37 = vector.load %arg10[%c0_23, %c0_24] : memref<128x64xbf16, #tpu.memory_space<vmem>>, vector<128x64xbf16>
    %cst_25 = arith.constant dense<0.000000e+00> : vector<8x64xf32>
    %38 = tpu.matmul %36, %37, %cst_25 {dimension_numbers = #tpu.dot_dimension_numbers<[1], [0], [0], [1], [0, 0, 1, 1], [], []>} : vector<8x128xbf16>, vector<128x64xbf16>, vector<8x64xf32> -> vector<8x64xf32>
    %c0_26 = arith.constant 0 : index
    %c0_27 = arith.constant 0 : index
    %39 = vector.load %arg11[%c0_26, %c0_27] : memref<1x64xf32, #tpu.memory_space<vmem>>, vector<1x64xf32>
    %40 = vector.broadcast %39 : vector<1x64xf32> to vector<8x64xf32>
    %41 = arith.addf %38, %40 : vector<8x64xf32>
    %cst_28 = arith.constant 0.000000e+00 : f32
    %42 = vector.broadcast %cst_28 : f32 to vector<8x64xf32>
    %43 = arith.maximumf %41, %42 : vector<8x64xf32>
    %44 = arith.mulf %35, %43 : vector<8x64xf32>
    %45 = arith.truncf %27 : vector<8x256xf32> to vector<8x256xbf16>
    %c0_29 = arith.constant 0 : index
    %c0_30 = arith.constant 0 : index
    %46 = vector.load %arg12[%c0_29, %c0_30] : memref<256x128xbf16, #tpu.memory_space<vmem>>, vector<256x128xbf16>
    %cst_31 = arith.constant dense<0.000000e+00> : vector<8x128xf32>
    %47 = tpu.matmul %45, %46, %cst_31 {dimension_numbers = #tpu.dot_dimension_numbers<[1], [0], [0], [1], [0, 0, 1, 1], [], []>} : vector<8x256xbf16>, vector<256x128xbf16>, vector<8x128xf32> -> vector<8x128xf32>
    %c0_32 = arith.constant 0 : index
    %c0_33 = arith.constant 0 : index
    %48 = vector.load %arg13[%c0_32, %c0_33] : memref<1x128xf32, #tpu.memory_space<vmem>>, vector<1x128xf32>
    %49 = vector.broadcast %48 : vector<1x128xf32> to vector<8x128xf32>
    %50 = arith.addf %47, %49 : vector<8x128xf32>
    %cst_34 = arith.constant 0.000000e+00 : f32
    %51 = vector.broadcast %cst_34 : f32 to vector<8x128xf32>
    %52 = arith.maximumf %50, %51 : vector<8x128xf32>
    %53 = arith.truncf %52 : vector<8x128xf32> to vector<8x128xbf16>
    %c0_35 = arith.constant 0 : index
    %c0_36 = arith.constant 0 : index
    %54 = vector.load %arg14[%c0_35, %c0_36] : memref<128x64xbf16, #tpu.memory_space<vmem>>, vector<128x64xbf16>
    %cst_37 = arith.constant dense<0.000000e+00> : vector<8x64xf32>
    %55 = tpu.matmul %53, %54, %cst_37 {dimension_numbers = #tpu.dot_dimension_numbers<[1], [0], [0], [1], [0, 0, 1, 1], [], []>} : vector<8x128xbf16>, vector<128x64xbf16>, vector<8x64xf32> -> vector<8x64xf32>
    %c0_38 = arith.constant 0 : index
    %c0_39 = arith.constant 0 : index
    %56 = vector.load %arg15[%c0_38, %c0_39] : memref<1x64xf32, #tpu.memory_space<vmem>>, vector<1x64xf32>
    %57 = vector.broadcast %56 : vector<1x64xf32> to vector<8x64xf32>
    %58 = arith.addf %55, %57 : vector<8x64xf32>
    %cst_40 = arith.constant 0.000000e+00 : f32
    %59 = vector.broadcast %cst_40 : f32 to vector<8x64xf32>
    %60 = arith.maximumf %58, %59 : vector<8x64xf32>
    %c0_41 = arith.constant 0 : index
    %c0_42 = arith.constant 0 : index
    %61 = vector.load %arg16[%c0_41, %c0_42] : memref<1x64xf32, #tpu.memory_space<vmem>>, vector<1x64xf32>
    %62 = vector.broadcast %61 : vector<1x64xf32> to vector<8x64xf32>
    %63 = arith.mulf %44, %62 : vector<8x64xf32>
    %c0_43 = arith.constant 0 : index
    %c0_44 = arith.constant 0 : index
    %64 = vector.load %arg17[%c0_43, %c0_44] : memref<1x64xf32, #tpu.memory_space<vmem>>, vector<1x64xf32>
    %65 = vector.broadcast %64 : vector<1x64xf32> to vector<8x64xf32>
    %66 = arith.mulf %60, %65 : vector<8x64xf32>
    %67 = arith.addf %63, %66 : vector<8x64xf32>
    %cst_45 = arith.constant dense<0.000000e+00> : vector<8xf32>
    %68 = vector.multi_reduction <add>, %67, %cst_45 [1] : vector<8x64xf32> to vector<8xf32>
    %69 = vector.shape_cast %68 : vector<8xf32> to vector<8x1xf32>
    %c0_46 = arith.constant 0 : index
    %c0_47 = arith.constant 0 : index
    %70 = vector.load %arg18[%c0_46, %c0_47] : memref<1x1xf32, #tpu.memory_space<vmem>>, vector<1x1xf32>
    %71 = vector.broadcast %70 : vector<1x1xf32> to vector<8x1xf32>
    %72 = arith.addf %69, %71 : vector<8x1xf32>
    %73 = arith.negf %72 : vector<8x1xf32>
    %74 = math.exp %73 : vector<8x1xf32>
    %cst_48 = arith.constant 1.000000e+00 : f32
    %75 = vector.broadcast %cst_48 : f32 to vector<8x1xf32>
    %76 = arith.addf %75, %74 : vector<8x1xf32>
    %77 = arith.divf %75, %76 : vector<8x1xf32>
    %c0_49 = arith.constant 0 : index
    %c0_50 = arith.constant 0 : index
    %78 = vector.load %arg19[%c0_49, %c0_50] : memref<8x1xf32, #tpu.memory_space<vmem>>, vector<8x1xf32>
    tpu.vector_store %arg19[%c0_49, %c0_50], %77 {strides = array<i32>} : memref<8x1xf32, #tpu.memory_space<vmem>>, vector<8x1xf32>,
    return
  }
  func.func @transform_0(%arg0: i32) -> (i32, i32) {
    %c0_i32 = arith.constant 0 : i32
    %c0_i32_0 = arith.constant 0 : i32
    return %arg0, %c0_i32 : i32, i32
  }
  func.func @transform_1(%arg0: i32) -> (i32, i32) {
    %c0_i32 = arith.constant 0 : i32
    %c0_i32_0 = arith.constant 0 : i32
    return %arg0, %c0_i32 : i32, i32
  }
  func.func @transform_2(%arg0: i32) -> (i32, i32) {
    %c0_i32 = arith.constant 0 : i32
    %c0_i32_0 = arith.constant 0 : i32
    %c0_i32_1 = arith.constant 0 : i32
    return %c0_i32, %c0_i32_0 : i32, i32
  }
  func.func @transform_3(%arg0: i32) -> (i32, i32) {
    %c0_i32 = arith.constant 0 : i32
    %c0_i32_0 = arith.constant 0 : i32
    %c0_i32_1 = arith.constant 0 : i32
    return %c0_i32, %c0_i32_0 : i32, i32
  }
  func.func @transform_4(%arg0: i32) -> (i32, i32) {
    %c0_i32 = arith.constant 0 : i32
    %c0_i32_0 = arith.constant 0 : i32
    %c0_i32_1 = arith.constant 0 : i32
    return %c0_i32, %c0_i32_0 : i32, i32
  }
  func.func @transform_5(%arg0: i32) -> (i32, i32) {
    %c0_i32 = arith.constant 0 : i32
    %c0_i32_0 = arith.constant 0 : i32
    %c0_i32_1 = arith.constant 0 : i32
    return %c0_i32, %c0_i32_0 : i32, i32
  }
  func.func @transform_6(%arg0: i32) -> (i32, i32) {
    %c0_i32 = arith.constant 0 : i32
    %c0_i32_0 = arith.constant 0 : i32
    %c0_i32_1 = arith.constant 0 : i32
    return %c0_i32, %c0_i32_0 : i32, i32
  }
  func.func @transform_7(%arg0: i32) -> (i32, i32) {
    %c0_i32 = arith.constant 0 : i32
    %c0_i32_0 = arith.constant 0 : i32
    %c0_i32_1 = arith.constant 0 : i32
    return %c0_i32, %c0_i32_0 : i32, i32
  }
  func.func @transform_8(%arg0: i32) -> (i32, i32) {
    %c0_i32 = arith.constant 0 : i32
    %c0_i32_0 = arith.constant 0 : i32
    %c0_i32_1 = arith.constant 0 : i32
    return %c0_i32, %c0_i32_0 : i32, i32
  }
  func.func @transform_9(%arg0: i32) -> (i32, i32) {
    %c0_i32 = arith.constant 0 : i32
    %c0_i32_0 = arith.constant 0 : i32
    %c0_i32_1 = arith.constant 0 : i32
    return %c0_i32, %c0_i32_0 : i32, i32
  }
  func.func @transform_10(%arg0: i32) -> (i32, i32) {
    %c0_i32 = arith.constant 0 : i32
    %c0_i32_0 = arith.constant 0 : i32
    %c0_i32_1 = arith.constant 0 : i32
    return %c0_i32, %c0_i32_0 : i32, i32
  }
  func.func @transform_11(%arg0: i32) -> (i32, i32) {
    %c0_i32 = arith.constant 0 : i32
    %c0_i32_0 = arith.constant 0 : i32
    %c0_i32_1 = arith.constant 0 : i32
    return %c0_i32, %c0_i32_0 : i32, i32
  }
  func.func @transform_12(%arg0: i32) -> (i32, i32) {
    %c0_i32 = arith.constant 0 : i32
    %c0_i32_0 = arith.constant 0 : i32
    %c0_i32_1 = arith.constant 0 : i32
    return %c0_i32, %c0_i32_0 : i32, i32
  }
  func.func @transform_13(%arg0: i32) -> (i32, i32) {
    %c0_i32 = arith.constant 0 : i32
    %c0_i32_0 = arith.constant 0 : i32
    %c0_i32_1 = arith.constant 0 : i32
    return %c0_i32, %c0_i32_0 : i32, i32
  }
  func.func @transform_14(%arg0: i32) -> (i32, i32) {
    %c0_i32 = arith.constant 0 : i32
    %c0_i32_0 = arith.constant 0 : i32
    %c0_i32_1 = arith.constant 0 : i32
    return %c0_i32, %c0_i32_0 : i32, i32
  }
  func.func @transform_15(%arg0: i32) -> (i32, i32) {
    %c0_i32 = arith.constant 0 : i32
    %c0_i32_0 = arith.constant 0 : i32
    %c0_i32_1 = arith.constant 0 : i32
    return %c0_i32, %c0_i32_0 : i32, i32
  }
  func.func @transform_16(%arg0: i32) -> (i32, i32) {
    %c0_i32 = arith.constant 0 : i32
    %c0_i32_0 = arith.constant 0 : i32
    %c0_i32_1 = arith.constant 0 : i32
    return %c0_i32, %c0_i32_0 : i32, i32
  }
  func.func @transform_17(%arg0: i32) -> (i32, i32) {
    %c0_i32 = arith.constant 0 : i32
    %c0_i32_0 = arith.constant 0 : i32
    %c0_i32_1 = arith.constant 0 : i32
    return %c0_i32, %c0_i32_0 : i32, i32
  }
  func.func @transform_18(%arg0: i32) -> (i32, i32) {
    %c0_i32 = arith.constant 0 : i32
    %c0_i32_0 = arith.constant 0 : i32
    return %arg0, %c0_i32 : i32, i32
  }
}

</mosaic_0001>

<llo_original>
// kernel: tpu_custom_call.1
$region0: #{tpu_custom_call.1}
  #allocation0 [shape = 'u32[]', space=smem, size = 0x4, offset = 0x4, fixed_abs, tag = 'smem constant byte address 0x4 - core index']
  #allocation1 [shape = 'u32[144,128]{1,0:T(1,128)}', space=vmem, size = 0x12000, scoped, tag = 'internal scratch']
  #allocation2 [shape = 'f32[1,1]{1,0:T(1,128)S(1)}', space=vmem, size = 0x200, scoped, tag = 'scoped memory for tpu_custom_call.1']
  %s0 = inlined_call_operand.vmem [shape: f32[8,384], index: 0, kind: input, shape index: {}]
  %s1 = inlined_call_operand.vmem [shape: f32[8,384], index: 1, kind: input, shape index: {}]
  %s2 = inlined_call_operand.hbm [shape: bf16[384,384], index: 2, kind: input, shape index: {}]
  %s3 = inlined_call_operand.hbm [shape: bf16[384,384], index: 3, kind: input, shape index: {}]
  %s4 = inlined_call_operand.vmem [shape: f32[1,128], index: 4, kind: input, shape index: {}]
  %s5 = inlined_call_operand.vmem [shape: f32[1,128], index: 5, kind: input, shape index: {}]
  %s6 = inlined_call_operand.vmem [shape: f32[1,256], index: 6, kind: input, shape index: {}]
  %s7 = inlined_call_operand.vmem [shape: bf16[128,64], index: 7, kind: input, shape index: {}]
  %s8 = inlined_call_operand.vmem [shape: f32[1,64], index: 8, kind: input, shape index: {}]
  %s9 = inlined_call_operand.vmem [shape: bf16[128,64], index: 9, kind: input, shape index: {}]
  %s10 = inlined_call_operand.vmem [shape: f32[1,64], index: 10, kind: input, shape index: {}]
  %s11 = inlined_call_operand.vmem [shape: bf16[256,128], index: 11, kind: input, shape index: {}]
  %s12 = inlined_call_operand.vmem [shape: f32[1,128], index: 12, kind: input, shape index: {}]
  %s13 = inlined_call_operand.vmem [shape: bf16[128,64], index: 13, kind: input, shape index: {}]
  %s14 = inlined_call_operand.vmem [shape: f32[1,64], index: 14, kind: input, shape index: {}]
  %s15 = inlined_call_operand.vmem [shape: f32[1,64], index: 15, kind: input, shape index: {}]
  %s16 = inlined_call_operand.vmem [shape: f32[1,64], index: 16, kind: input, shape index: {}]
  %s17 = inlined_call_operand.<no memory space> [shape: f32[1,1], index: 17, kind: input, shape index: {}]
  %s18 = inlined_call_operand.vmem [shape: f32[8,1], index: 18, kind: output, shape index: {}]
  %s19 = sld [smem:[#allocation0]]
  $region90: #{tpu_custom_call.1} parent=0
    _
  %s21 = ssub.s32 1, %s19
  %s22 = scalar_select 0, %s21, %s19
  %v23 = vstv %s17
  %24 = vst [vmem:[#allocation2] sm:$0x1] %v23
  $region1: #{tpu_custom_call.1} parent=0
    #allocation3 [shape = 'u8[294912]{0}', space=vmem, size = 0x48000, scoped, tag = 'input window, operand 2, single buffered']
    #allocation4 [shape = 's32[1]{0}', space=sflag, size = 0x4, scoped, tag = 'scoped memory for tpu_custom_call.1']
    #allocation5 [shape = 'u8[294912]{0}', space=vmem, size = 0x48000, scoped, tag = 'input window, operand 3, single buffered']
    #allocation6 [shape = 's32[1]{0}', space=sflag, size = 0x4, scoped, tag = 'scoped memory for tpu_custom_call.1']
    %25 = vsyncpa [#allocation4], 0
    %26 = vsyncpa [#allocation6], 0
    // Predicated region
    $region2: #{tpu_custom_call.1} parent=1 // pred_check
      _
    $region3: #{tpu_custom_call.1} parent=1 // pred_check_branch
      %28 = sbr.rel (0) target = $region5
    $region4: #{tpu_custom_call.1} parent=1 // pred_region
      _
    $region5: #{tpu_custom_call.1} parent=1 // pred_fallthru
      _
    // Predicated region
    $region6: #{tpu_custom_call.1} parent=1 // pred_check
      _
    $region7: #{tpu_custom_call.1} parent=1 // pred_check_branch
      %30 = sbr.rel (0) target = $region9
    $region8: #{tpu_custom_call.1} parent=1 // pred_region
      _
    $region9: #{tpu_custom_call.1} parent=1 // pred_fallthru
      _
    // Predicated region
    $region10: #{tpu_custom_call.1} parent=1 // pred_check
      _
    $region11: #{tpu_custom_call.1} parent=1 // pred_check_branch
      %32 = sbr.rel (0) target = $region13
    $region12: #{tpu_custom_call.1} parent=1 // pred_region
      %s34 = ssub.s32 9216, 9216
      %35 = vsyncadd [#allocation4], %s34
      %s36 = sshll.u32 [#allocation3], 4
      %s37 = int_to_ptr.vmem [resolvable:$true] %s36
      %42 = dma.hbm_to_vmem [thread:$0]  %s2, 9216, %s37, [#allocation4], 192, 192, 12
    $region13: #{tpu_custom_call.1} parent=1 // pred_fallthru
      _
    // Predicated region
    $region14: #{tpu_custom_call.1} parent=1 // pred_check
      _
    $region15: #{tpu_custom_call.1} parent=1 // pred_check_branch
      %44 = sbr.rel (0) target = $region17
    $region16: #{tpu_custom_call.1} parent=1 // pred_region
      %s46 = ssub.s32 9216, 9216
      %47 = vsyncadd [#allocation6], %s46
      %s48 = sshll.u32 [#allocation5], 4
      %s49 = int_to_ptr.vmem [resolvable:$true] %s48
      %54 = dma.hbm_to_vmem [thread:$0]  %s3, 9216, %s49, [#allocation6], 192, 192, 12
    $region17: #{tpu_custom_call.1} parent=1 // pred_fallthru
      _
    // Predicated region
    $region18: #{tpu_custom_call.1} parent=1 // pred_check
      _
    $region19: #{tpu_custom_call.1} parent=1 // pred_check_branch
      %56 = sbr.rel (0) target = $region21
    $region20: #{tpu_custom_call.1} parent=1 // pred_region
      _
    $region21: #{tpu_custom_call.1} parent=1 // pred_fallthru
      _
    // Predicated region
    $region22: #{tpu_custom_call.1} parent=1 // pred_check
      _
    $region23: #{tpu_custom_call.1} parent=1 // pred_check_branch
      %58 = sbr.rel (0) target = $region25
    $region24: #{tpu_custom_call.1} parent=1 // pred_region
      _
    $region25: #{tpu_custom_call.1} parent=1 // pred_fallthru
      _
    // Predicated region
    $region26: #{tpu_custom_call.1} parent=1 // pred_check
      _
    $region27: #{tpu_custom_call.1} parent=1 // pred_check_branch
      %60 = sbr.rel (0) target = $region29
    $region28: #{tpu_custom_call.1} parent=1 // pred_region
      _
    $region29: #{tpu_custom_call.1} parent=1 // pred_fallthru
      _
    // Predicated region
    $region30: #{tpu_custom_call.1} parent=1 // pred_check
      _
    $region31: #{tpu_custom_call.1} parent=1 // pred_check_branch
      %62 = sbr.rel (0) target = $region33
    $region32: #{tpu_custom_call.1} parent=1 // pred_region
      _
    $region33: #{tpu_custom_call.1} parent=1 // pred_fallthru
      _
    // Predicated region
    $region34: #{tpu_custom_call.1} parent=1 // pred_check
      _
    $region35: #{tpu_custom_call.1} parent=1 // pred_check_branch
      %64 = sbr.rel (0) target = $region37
    $region36: #{tpu_custom_call.1} parent=1 // pred_region
      _
    $region37: #{tpu_custom_call.1} parent=1 // pred_fallthru
      _
    // Predicated region
    $region38: #{tpu_custom_call.1} parent=1 // pred_check
      _
    $region39: #{tpu_custom_call.1} parent=1 // pred_check_branch
      %66 = sbr.rel (0) target = $region41
    $region40: #{tpu_custom_call.1} parent=1 // pred_region
      _
    $region41: #{tpu_custom_call.1} parent=1 // pred_fallthru
      _
    // Predicated region
    $region42: #{tpu_custom_call.1} parent=1 // pred_check
      _
    $region43: #{tpu_custom_call.1} parent=1 // pred_check_branch
      %68 = sbr.rel (0) target = $region45
    $region44: #{tpu_custom_call.1} parent=1 // pred_region
      _
    $region45: #{tpu_custom_call.1} parent=1 // pred_fallthru
      _
    // Predicated region
    $region46: #{tpu_custom_call.1} parent=1 // pred_check
      _
    $region47: #{tpu_custom_call.1} parent=1 // pred_check_branch
      %70 = sbr.rel (0) target = $region49
    $region48: #{tpu_custom_call.1} parent=1 // pred_region
      _
    $region49: #{tpu_custom_call.1} parent=1 // pred_fallthru
      _
    // Predicated region
    $region50: #{tpu_custom_call.1} parent=1 // pred_check
      _
    $region51: #{tpu_custom_call.1} parent=1 // pred_check_branch
      %72 = sbr.rel (0) target = $region53
    $region52: #{tpu_custom_call.1} parent=1 // pred_region
      _
    $region53: #{tpu_custom_call.1} parent=1 // pred_fallthru
      _
    // Predicated region
    $region54: #{tpu_custom_call.1} parent=1 // pred_check
      _
    $region55: #{tpu_custom_call.1} parent=1 // pred_check_branch
      %74 = sbr.rel (0) target = $region57
    $region56: #{tpu_custom_call.1} parent=1 // pred_region
      _
    $region57: #{tpu_custom_call.1} parent=1 // pred_fallthru
      _
    // Predicated region
    $region58: #{tpu_custom_call.1} parent=1 // pred_check
      _
    $region59: #{tpu_custom_call.1} parent=1 // pred_check_branch
      %76 = sbr.rel (0) target = $region61
    $region60: #{tpu_custom_call.1} parent=1 // pred_region
      _
    $region61: #{tpu_custom_call.1} parent=1 // pred_fallthru
      _
    // Predicated region
    $region62: #{tpu_custom_call.1} parent=1 // pred_check
      _
    $region63: #{tpu_custom_call.1} parent=1 // pred_check_branch
      %78 = sbr.rel (0) target = $region65
    $region64: #{tpu_custom_call.1} parent=1 // pred_region
      _
    $region65: #{tpu_custom_call.1} parent=1 // pred_fallthru
      _
    // Predicated region
    $region66: #{tpu_custom_call.1} parent=1 // pred_check
      _
    $region67: #{tpu_custom_call.1} parent=1 // pred_check_branch
      %80 = sbr.rel (0) target = $region69
    $region68: #{tpu_custom_call.1} parent=1 // pred_region
      _
    $region69: #{tpu_custom_call.1} parent=1 // pred_fallthru
      _
    // Predicated region
    $region70: #{tpu_custom_call.1} parent=1 // pred_check
      _
    $region71: #{tpu_custom_call.1} parent=1 // pred_check_branch
      %82 = sbr.rel (0) target = $region73
    $region72: #{tpu_custom_call.1} parent=1 // pred_region
      _
    $region73: #{tpu_custom_call.1} parent=1 // pred_fallthru
      _
    // Predicated region
    $region74: #{tpu_custom_call.1} parent=1 // pred_check
      _
    $region75: #{tpu_custom_call.1} parent=1 // pred_check_branch
      %84 = sbr.rel (0) target = $region77
    $region76: #{tpu_custom_call.1} parent=1 // pred_region
      %85 = dma.done [#allocation4], 9216
    $region77: #{tpu_custom_call.1} parent=1 // pred_fallthru
      _
    // Predicated region
    $region78: #{tpu_custom_call.1} parent=1 // pred_check
      _
    $region79: #{tpu_custom_call.1} parent=1 // pred_check_branch
      %87 = sbr.rel (0) target = $region81
    $region80: #{tpu_custom_call.1} parent=1 // pred_region
      %88 = dma.done [#allocation6], 9216
    $region81: #{tpu_custom_call.1} parent=1 // pred_fallthru
      _
    %v90 = vld [vmem:[%s0] sm:$0xff]
    %v91 = vld [vmem:[%s0 + $0x8] sm:$0xff]
    %v92 = vld [vmem:[%s0 + $0x10] sm:$0xff]
    %v93 = vpack.c.bf16 %v90, %v90
    %v94 = vpack.c.bf16 %v91, %v91
    %v95 = vpack.c.bf16 %v92, %v92
    %v96 = vld [vmem:[%s1] sm:$0xff]
    %v97 = vld [vmem:[%s1 + $0x8] sm:$0xff]
    %v98 = vld [vmem:[%s1 + $0x10] sm:$0xff]
    %v99 = vpack.c.bf16 %v96, %v96
    %v100 = vpack.c.bf16 %v97, %v97
    %v101 = vpack.c.bf16 %v98, %v98
    %v102 = vld [vmem:[#allocation3] sm:$0xff]
    %v103 = vld [vmem:[#allocation3 + $0x8] sm:$0xf]
    %v104 = vld [vmem:[#allocation3 + $0xc] sm:$0xff]
    %v105 = vld [vmem:[#allocation3 + $0x14] sm:$0xf]
    %v106 = vld [vmem:[#allocation3 + $0x18] sm:$0xff]
    %v107 = vld [vmem:[#allocation3 + $0x20] sm:$0xf]
    %v108 = vld [vmem:[#allocation3 + $0x24] sm:$0xff]
    %v109 = vld [vmem:[#allocation3 + $0x2c] sm:$0xf]
    %v110 = vld [vmem:[#allocation3 + $0x30] sm:$0xff]
    %v111 = vld [vmem:[#allocation3 + $0x38] sm:$0xf]
    %v112 = vld [vmem:[#allocation3 + $0x3c] sm:$0xff]
    %v113 = vld [vmem:[#allocation3 + $0x44] sm:$0xf]
    %v114 = vld [vmem:[#allocation3 + $0x48] sm:$0xff]
    %v115 = vld [vmem:[#allocation3 + $0x50] sm:$0xf]
    %v116 = vld [vmem:[#allocation3 + $0x54] sm:$0xff]
    %v117 = vld [vmem:[#allocation3 + $0x5c] sm:$0xf]
    %v118 = vld [vmem:[#allocation3 + $0x60] sm:$0xff]
    %v119 = vld [vmem:[#allocation3 + $0x68] sm:$0xf]
    %v120 = vld [vmem:[#allocation3 + $0x6c] sm:$0xff]
    %v121 = vld [vmem:[#allocation3 + $0x74] sm:$0xf]
    %v122 = vld [vmem:[#allocation3 + $0x78] sm:$0xff]
    %v123 = vld [vmem:[#allocation3 + $0x80] sm:$0xf]
    %v124 = vld [vmem:[#allocation3 + $0x84] sm:$0xff]
    %v125 = vld [vmem:[#allocation3 + $0x8c] sm:$0xf]
    %v126 = vld [vmem:[#allocation3 + $0x90] sm:$0xff]
    %v127 = vld [vmem:[#allocation3 + $0x98] sm:$0xf]
    %v128 = vld [vmem:[#allocation3 + $0x9c] sm:$0xff]
    %v129 = vld [vmem:[#allocation3 + $0xa4] sm:$0xf]
    %v130 = vld [vmem:[#allocation3 + $0xa8] sm:$0xff]
    %v131 = vld [vmem:[#allocation3 + $0xb0] sm:$0xf]
    %v132 = vld [vmem:[#allocation3 + $0xb4] sm:$0xff]
    %v133 = vld [vmem:[#allocation3 + $0xbc] sm:$0xf]
    %v134 = vld [vmem:[#allocation3 + $0xc0] sm:$0xff]
    %v135 = vld [vmem:[#allocation3 + $0xc8] sm:$0xf]
    %v136 = vld [vmem:[#allocation3 + $0xcc] sm:$0xff]
    %v137 = vld [vmem:[#allocation3 + $0xd4] sm:$0xf]
    %v138 = vld [vmem:[#allocation3 + $0xd8] sm:$0xff]
    %v139 = vld [vmem:[#allocation3 + $0xe0] sm:$0xf]
    %v140 = vld [vmem:[#allocation3 + $0xe4] sm:$0xff]
    %v141 = vld [vmem:[#allocation3 + $0xec] sm:$0xf]
    %v142 = vld [vmem:[#allocation3 + $0xf0] sm:$0xff]
    %v143 = vld [vmem:[#allocation3 + $0xf8] sm:$0xf]
    %v144 = vld [vmem:[#allocation3 + $0xfc] sm:$0xff]
    %v145 = vld [vmem:[#allocation3 + $0x104] sm:$0xf]
    %v146 = vld [vmem:[#allocation3 + $0x108] sm:$0xff]
    %v147 = vld [vmem:[#allocation3 + $0x110] sm:$0xf]
    %v148 = vld [vmem:[#allocation3 + $0x114] sm:$0xff]
    %v149 = vld [vmem:[#allocation3 + $0x11c] sm:$0xf]
    %v150 = vld [vmem:[#allocation3 + $0x120] sm:$0xff]
    %v151 = vld [vmem:[#allocation3 + $0x128] sm:$0xf]
    %v152 = vld [vmem:[#allocation3 + $0x12c] sm:$0xff]
    %v153 = vld [vmem:[#allocation3 + $0x134] sm:$0xf]
    %v154 = vld [vmem:[#allocation3 + $0x138] sm:$0xff]
    %v155 = vld [vmem:[#allocation3 + $0x140] sm:$0xf]
    %v156 = vld [vmem:[#allocation3 + $0x144] sm:$0xff]
    %v157 = vld [vmem:[#allocation3 + $0x14c] sm:$0xf]
    %v158 = vld [vmem:[#allocation3 + $0x150] sm:$0xff]
    %v159 = vld [vmem:[#allocation3 + $0x158] sm:$0xf]
    %v160 = vld [vmem:[#allocation3 + $0x15c] sm:$0xff]
    %v161 = vld [vmem:[#allocation3 + $0x164] sm:$0xf]
    %v162 = vld [vmem:[#allocation3 + $0x168] sm:$0xff]
    %v163 = vld [vmem:[#allocation3 + $0x170] sm:$0xf]
    %v164 = vld [vmem:[#allocation3 + $0x174] sm:$0xff]
    %v165 = vld [vmem:[#allocation3 + $0x17c] sm:$0xf]
    %v166 = vld [vmem:[#allocation3 + $0x180] sm:$0xff]
    %v167 = vld [vmem:[#allocation3 + $0x188] sm:$0xf]
    %v168 = vld [vmem:[#allocation3 + $0x18c] sm:$0xff]
    %v169 = vld [vmem:[#allocation3 + $0x194] sm:$0xf]
    %v170 = vld [vmem:[#allocation3 + $0x198] sm:$0xff]
    %v171 = vld [vmem:[#allocation3 + $0x1a0] sm:$0xf]
    %v172 = vld [vmem:[#allocation3 + $0x1a4] sm:$0xff]
    %v173 = vld [vmem:[#allocation3 + $0x1ac] sm:$0xf]
    %v174 = vld [vmem:[#allocation3 + $0x1b0] sm:$0xff]
    %v175 = vld [vmem:[#allocation3 + $0x1b8] sm:$0xf]
    %v176 = vld [vmem:[#allocation3 + $0x1bc] sm:$0xff]
    %v177 = vld [vmem:[#allocation3 + $0x1c4] sm:$0xf]
    %v178 = vld [vmem:[#allocation3 + $0x1c8] sm:$0xff]
    %v179 = vld [vmem:[#allocation3 + $0x1d0] sm:$0xf]
    %v180 = vld [vmem:[#allocation3 + $0x1d4] sm:$0xff]
    %v181 = vld [vmem:[#allocation3 + $0x1dc] sm:$0xf]
    %v182 = vld [vmem:[#allocation3 + $0x1e0] sm:$0xff]
    %v183 = vld [vmem:[#allocation3 + $0x1e8] sm:$0xf]
    %v184 = vld [vmem:[#allocation3 + $0x1ec] sm:$0xff]
    %v185 = vld [vmem:[#allocation3 + $0x1f4] sm:$0xf]
    %v186 = vld [vmem:[#allocation3 + $0x1f8] sm:$0xff]
    %v187 = vld [vmem:[#allocation3 + $0x200] sm:$0xf]
    %v188 = vld [vmem:[#allocation3 + $0x204] sm:$0xff]
    %v189 = vld [vmem:[#allocation3 + $0x20c] sm:$0xf]
    %v190 = vld [vmem:[#allocation3 + $0x210] sm:$0xff]
    %v191 = vld [vmem:[#allocation3 + $0x218] sm:$0xf]
    %v192 = vld [vmem:[#allocation3 + $0x21c] sm:$0xff]
    %v193 = vld [vmem:[#allocation3 + $0x224] sm:$0xf]
    %v194 = vld [vmem:[#allocation3 + $0x228] sm:$0xff]
    %v195 = vld [vmem:[#allocation3 + $0x230] sm:$0xf]
    %v196 = vld [vmem:[#allocation3 + $0x234] sm:$0xff]
    %v197 = vld [vmem:[#allocation3 + $0x23c] sm:$0xf]
    %v294 = vunpack.c.l.b16 %v102
    %v295 = vunpack.c.h.b16 %v102
    %v296 = vunpack.c.l.b16 %v103
    %v297 = vunpack.c.l.b16 %v104
    %v298 = vunpack.c.h.b16 %v104
    %v299 = vunpack.c.l.b16 %v105
    %v300 = vunpack.c.l.b16 %v106
    %v301 = vunpack.c.h.b16 %v106
    %v302 = vunpack.c.l.b16 %v107
    %v303 = vunpack.c.l.b16 %v108
    %v304 = vunpack.c.h.b16 %v108
    %v305 = vunpack.c.l.b16 %v109
    %v306 = vunpack.c.l.b16 %v110
    %v307 = vunpack.c.h.b16 %v110
    %v308 = vunpack.c.l.b16 %v111
    %v309 = vunpack.c.l.b16 %v112
    %v310 = vunpack.c.h.b16 %v112
    %v311 = vunpack.c.l.b16 %v113
    %v312 = vunpack.c.l.b16 %v114
    %v313 = vunpack.c.h.b16 %v114
    %v314 = vunpack.c.l.b16 %v115
    %v315 = vunpack.c.l.b16 %v116
    %v316 = vunpack.c.h.b16 %v116
    %v317 = vunpack.c.l.b16 %v117
    %v318 = vunpack.c.l.b16 %v118
    %v319 = vunpack.c.h.b16 %v118
    %v320 = vunpack.c.l.b16 %v119
    %v321 = vunpack.c.l.b16 %v120
    %v322 = vunpack.c.h.b16 %v120
    %v323 = vunpack.c.l.b16 %v121
    %v324 = vunpack.c.l.b16 %v122
    %v325 = vunpack.c.h.b16 %v122
    %v326 = vunpack.c.l.b16 %v123
    %v327 = vunpack.c.l.b16 %v124
    %v328 = vunpack.c.h.b16 %v124
    %v329 = vunpack.c.l.b16 %v125
    %v330 = vunpack.c.l.b16 %v126
    %v331 = vunpack.c.h.b16 %v126
    %v332 = vunpack.c.l.b16 %v127
    %v333 = vunpack.c.l.b16 %v128
    %v334 = vunpack.c.h.b16 %v128
    %v335 = vunpack.c.l.b16 %v129
    %v336 = vunpack.c.l.b16 %v130
    %v337 = vunpack.c.h.b16 %v130
    %v338 = vunpack.c.l.b16 %v131
    %v339 = vunpack.c.l.b16 %v132
    %v340 = vunpack.c.h.b16 %v132
    %v341 = vunpack.c.l.b16 %v133
    %v342 = vunpack.c.l.b16 %v134
    %v343 = vunpack.c.h.b16 %v134
    %v344 = vunpack.c.l.b16 %v135
    %v345 = vunpack.c.l.b16 %v136
    %v346 = vunpack.c.h.b16 %v136
    %v347 = vunpack.c.l.b16 %v137
    %v348 = vunpack.c.l.b16 %v138
    %v349 = vunpack.c.h.b16 %v138
    %v350 = vunpack.c.l.b16 %v139
    %v351 = vunpack.c.l.b16 %v140
    %v352 = vunpack.c.h.b16 %v140
    %v353 = vunpack.c.l.b16 %v141
    %v354 = vunpack.c.l.b16 %v142
    %v355 = vunpack.c.h.b16 %v142
    %v356 = vunpack.c.l.b16 %v143
    %v357 = vunpack.c.l.b16 %v144
    %v358 = vunpack.c.h.b16 %v144
    %v359 = vunpack.c.l.b16 %v145
    %v360 = vunpack.c.l.b16 %v146
    %v361 = vunpack.c.h.b16 %v146
    %v362 = vunpack.c.l.b16 %v147
    %v363 = vunpack.c.l.b16 %v148
    %v364 = vunpack.c.h.b16 %v148
    %v365 = vunpack.c.l.b16 %v149
    %v366 = vunpack.c.l.b16 %v150
    %v367 = vunpack.c.h.b16 %v150
    %v368 = vunpack.c.l.b16 %v151
    %v369 = vunpack.c.l.b16 %v152
    %v370 = vunpack.c.h.b16 %v152
    %v371 = vunpack.c.l.b16 %v153
    %v372 = vunpack.c.l.b16 %v154
    %v373 = vunpack.c.h.b16 %v154
    %v374 = vunpack.c.l.b16 %v155
    %v375 = vunpack.c.l.b16 %v156
    %v376 = vunpack.c.h.b16 %v156
    %v377 = vunpack.c.l.b16 %v157
    %v378 = vunpack.c.l.b16 %v158
    %v379 = vunpack.c.h.b16 %v158
    %v380 = vunpack.c.l.b16 %v159
    %v381 = vunpack.c.l.b16 %v160
    %v382 = vunpack.c.h.b16 %v160
    %v383 = vunpack.c.l.b16 %v161
    %v384 = vunpack.c.l.b16 %v162
    %v385 = vunpack.c.h.b16 %v162
    %v386 = vunpack.c.l.b16 %v163
    %v387 = vunpack.c.l.b16 %v164
    %v388 = vunpack.c.h.b16 %v164
    %v389 = vunpack.c.l.b16 %v165
    %v390 = vunpack.c.l.b16 %v166
    %v391 = vunpack.c.h.b16 %v166
    %v392 = vunpack.c.l.b16 %v167
    %v393 = vunpack.c.l.b16 %v168
    %v394 = vunpack.c.h.b16 %v168
    %v395 = vunpack.c.l.b16 %v169
    %v396 = vunpack.c.l.b16 %v170
    %v397 = vunpack.c.h.b16 %v170
    %v398 = vunpack.c.l.b16 %v171
    %v399 = vunpack.c.l.b16 %v172
    %v400 = vunpack.c.h.b16 %v172
    %v401 = vunpack.c.l.b16 %v173
    %v402 = vunpack.c.l.b16 %v174
    %v403 = vunpack.c.h.b16 %v174
    %v404 = vunpack.c.l.b16 %v175
    %v405 = vunpack.c.l.b16 %v176
    %v406 = vunpack.c.h.b16 %v176
    %v407 = vunpack.c.l.b16 %v177
    %v408 = vunpack.c.l.b16 %v178
    %v409 = vunpack.c.h.b16 %v178
    %v410 = vunpack.c.l.b16 %v179
    %v411 = vunpack.c.l.b16 %v180
    %v412 = vunpack.c.h.b16 %v180
    %v413 = vunpack.c.l.b16 %v181
    %v414 = vunpack.c.l.b16 %v182
    %v415 = vunpack.c.h.b16 %v182
    %v416 = vunpack.c.l.b16 %v183
    %v417 = vunpack.c.l.b16 %v184
    %v418 = vunpack.c.h.b16 %v184
    %v419 = vunpack.c.l.b16 %v185
    %v420 = vunpack.c.l.b16 %v186
    %v421 = vunpack.c.h.b16 %v186
    %v422 = vunpack.c.l.b16 %v187
    %v423 = vunpack.c.l.b16 %v188
    %v424 = vunpack.c.h.b16 %v188
    %v425 = vunpack.c.l.b16 %v189
    %v426 = vunpack.c.l.b16 %v190
    %v427 = vunpack.c.h.b16 %v190
    %v428 = vunpack.c.l.b16 %v191
    %v429 = vunpack.c.l.b16 %v192
    %v430 = vunpack.c.h.b16 %v192
    %v431 = vunpack.c.l.b16 %v193
    %v432 = vunpack.c.l.b16 %v194
    %v433 = vunpack.c.h.b16 %v194
    %v434 = vunpack.c.l.b16 %v195
    %v435 = vunpack.c.l.b16 %v196
    %v436 = vunpack.c.h.b16 %v196
    %v437 = vunpack.c.l.b16 %v197
    %v438 = vpack.c.b16 %v297, %v294
    %v439 = vpack.c.b16 %v298, %v295
    %v440 = vpack.c.b16 %v299, %v296
    %v441 = vpack.c.b16 %v303, %v300
    %v442 = vpack.c.b16 %v304, %v301
    %v443 = vpack.c.b16 %v305, %v302
    %v444 = vpack.c.b16 %v309, %v306
    %v445 = vpack.c.b16 %v310, %v307
    %v446 = vpack.c.b16 %v311, %v308
    %v447 = vpack.c.b16 %v315, %v312
    %v448 = vpack.c.b16 %v316, %v313
    %v449 = vpack.c.b16 %v317, %v314
    %v450 = vpack.c.b16 %v321, %v318
    %v451 = vpack.c.b16 %v322, %v319
    %v452 = vpack.c.b16 %v323, %v320
    %v453 = vpack.c.b16 %v327, %v324
    %v454 = vpack.c.b16 %v328, %v325
    %v455 = vpack.c.b16 %v329, %v326
    %v456 = vpack.c.b16 %v333, %v330
    %v457 = vpack.c.b16 %v334, %v331
    %v458 = vpack.c.b16 %v335, %v332
    %v459 = vpack.c.b16 %v339, %v336
    %v460 = vpack.c.b16 %v340, %v337
    %v461 = vpack.c.b16 %v341, %v338
    %v462 = vpack.c.b16 %v345, %v342
    %v463 = vpack.c.b16 %v346, %v343
    %v464 = vpack.c.b16 %v347, %v344
    %v465 = vpack.c.b16 %v351, %v348
    %v466 = vpack.c.b16 %v352, %v349
    %v467 = vpack.c.b16 %v353, %v350
    %v468 = vpack.c.b16 %v357, %v354
    %v469 = vpack.c.b16 %v358, %v355
    %v470 = vpack.c.b16 %v359, %v356
    %v471 = vpack.c.b16 %v363, %v360
    %v472 = vpack.c.b16 %v364, %v361
    %v473 = vpack.c.b16 %v365, %v362
    %v474 = vpack.c.b16 %v369, %v366
    %v475 = vpack.c.b16 %v370, %v367
    %v476 = vpack.c.b16 %v371, %v368
    %v477 = vpack.c.b16 %v375, %v372
    %v478 = vpack.c.b16 %v376, %v373
    %v479 = vpack.c.b16 %v377, %v374
    %v480 = vpack.c.b16 %v381, %v378
    %v481 = vpack.c.b16 %v382, %v379
    %v482 = vpack.c.b16 %v383, %v380
    %v483 = vpack.c.b16 %v387, %v384
    %v484 = vpack.c.b16 %v388, %v385
    %v485 = vpack.c.b16 %v389, %v386
    %v486 = vpack.c.b16 %v393, %v390
    %v487 = vpack.c.b16 %v394, %v391
    %v488 = vpack.c.b16 %v395, %v392
    %v489 = vpack.c.b16 %v399, %v396
    %v490 = vpack.c.b16 %v400, %v397
    %v491 = vpack.c.b16 %v401, %v398
    %v492 = vpack.c.b16 %v405, %v402
    %v493 = vpack.c.b16 %v406, %v403
    %v494 = vpack.c.b16 %v407, %v404
    %v495 = vpack.c.b16 %v411, %v408
    %v496 = vpack.c.b16 %v412, %v409
    %v497 = vpack.c.b16 %v413, %v410
    %v498 = vpack.c.b16 %v417, %v414
    %v499 = vpack.c.b16 %v418, %v415
    %v500 = vpack.c.b16 %v419, %v416
    %v501 = vpack.c.b16 %v423, %v420
    %v502 = vpack.c.b16 %v424, %v421
    %v503 = vpack.c.b16 %v425, %v422
    %v504 = vpack.c.b16 %v429, %v426
    %v505 = vpack.c.b16 %v430, %v427
    %v506 = vpack.c.b16 %v431, %v428
    %v507 = vpack.c.b16 %v435, %v432
    %v508 = vpack.c.b16 %v436, %v433
    %v509 = vpack.c.b16 %v437, %v434
    %582 = vmatprep.subr.bf16.mxu0 %v439
    %583 = vmatpush1.bf16.msra.mxu0 %v438
    %584 = vmatprep.subr.bf16.mxu0 %v442
    %585 = vmatpush1.bf16.msra.mxu0 %v441
    %586 = vmatprep.subr.bf16.mxu0 %v445
    %587 = vmatpush1.bf16.msra.mxu0 %v444
    %588 = vmatprep.subr.bf16.mxu0 %v448
    %589 = vmatpush1.bf16.msra.mxu0 %v447
    %590 = vmatprep.subr.bf16.mxu0 %v451
    %591 = vmatpush1.bf16.msra.mxu0 %v450
    %592 = vmatprep.subr.bf16.mxu0 %v454
    %593 = vmatpush1.bf16.msra.mxu0 %v453
    %594 = vmatprep.subr.bf16.mxu0 %v457
    %595 = vmatpush1.bf16.msra.mxu0 %v456
    %596 = vmatprep.subr.bf16.mxu0 %v460
    %597 = vmatpush1.bf16.msra.mxu0 %v459
    %598 = vmatprep.subr.bf16.mxu0 %v463
    %599 = vmatpush1.bf16.msra.mxu0 %v462
    %600 = vmatprep.subr.bf16.mxu0 %v466
    %601 = vmatpush1.bf16.msra.mxu0 %v465
    %602 = vmatprep.subr.bf16.mxu0 %v469
    %603 = vmatpush1.bf16.msra.mxu0 %v468
    %604 = vmatprep.subr.bf16.mxu0 %v472
    %605 = vmatpush1.bf16.msra.mxu0 %v471
    %606 = vmatprep.subr.bf16.mxu0 %v475
    %607 = vmatpush1.bf16.msra.mxu0 %v474
    %608 = vmatprep.subr.bf16.mxu0 %v478
    %609 = vmatpush1.bf16.msra.mxu0 %v477
    %610 = vmatprep.subr.bf16.mxu0 %v481
    %611 = vmatpush1.bf16.msra.mxu0 %v480
    %612 = vmatprep.subr.bf16.mxu0 %v484
    %613 = vmatpush1.bf16.msra.mxu0 %v483
    %614 = vmatprep.mubr.bf16.mxu0 %v94
    %615 = vmatmul.mubr.bf16.gmra.mrb[0].mxu0 %v93
    %v616 = vpop.f32.mrb[0].mxu0
    %v617 = vadd.f32 0.0, %v616
    %v618 = vpop.f32.mrb[0].mxu0
    %v619 = vadd.f32 0.0, %v618
    %v620 = vpop.f32.mrb[0].mxu0
    %v621 = vpop.f32.mrb[0].mxu0
    %622 = vdwg.mxu0
    %623 = vmatprep.subr.bf16.mxu0 %v487
    %624 = vmatpush1.bf16.msra.mxu0 %v486
    %625 = vmatprep.subr.bf16.mxu0 %v490
    %626 = vmatpush1.bf16.msra.mxu0 %v489
    %627 = vmatprep.subr.bf16.mxu0 %v493
    %628 = vmatpush1.bf16.msra.mxu0 %v492
    %629 = vmatprep.subr.bf16.mxu0 %v496
    %630 = vmatpush1.bf16.msra.mxu0 %v495
    %631 = vmatprep.subr.bf16.mxu0 %v499
    %632 = vmatpush1.bf16.msra.mxu0 %v498
    %633 = vmatprep.subr.bf16.mxu0 %v502
    %634 = vmatpush1.bf16.msra.mxu0 %v501
    %635 = vmatprep.subr.bf16.mxu0 %v505
    %636 = vmatpush1.bf16.msra.mxu0 %v504
    %637 = vmatprep.subr.bf16.mxu0 %v508
    %638 = vmatpush1.bf16.msra.mxu0 %v507
    %639 = vmatprep.subr.bf16.mxu0 0
    %640 = vmatpush1.bf16.msra.mxu0 0
    %641 = vmatprep.subr.bf16.mxu0 0
    %642 = vmatpush1.bf16.msra.mxu0 0
    %643 = vmatprep.subr.bf16.mxu0 0
    %644 = vmatpush1.bf16.msra.mxu0 0
    %645 = vmatprep.subr.bf16.mxu0 0
    %646 = vmatpush1.bf16.msra.mxu0 0
    %647 = vmatprep.subr.bf16.mxu0 0
    %648 = vmatpush1.bf16.msra.mxu0 0
    %649 = vmatprep.subr.bf16.mxu0 0
    %650 = vmatpush1.bf16.msra.mxu0 0
    %651 = vmatprep.subr.bf16.mxu0 0
    %652 = vmatpush1.bf16.msra.mxu0 0
    %653 = vmatprep.subr.bf16.mxu0 0
    %654 = vmatpush1.bf16.msra.mxu0 0
    %655 = vmatprep.mubr.bf16.mxu0 0
    %656 = vmatmul.mubr.bf16.gmra.mrb[0].mxu0 %v95
    %v657 = vpop.f32.mrb[0].mxu0
    %v658 = vadd.f32 %v617, %v657
    %v659 = vpop.f32.mrb[0].mxu0
    %v660 = vadd.f32 %v619, %v659
    %v661 = vpop.f32.mrb[0].mxu0
    %v662 = vpop.f32.mrb[0].mxu0
    %663 = vdwg.mxu0
    %664 = vmatprep.subr.bf16.mxu0 0
    %665 = vmatpush1.bf16.msra.mxu0 %v440
    %666 = vmatprep.subr.bf16.mxu0 0
    %667 = vmatpush1.bf16.msra.mxu0 %v443
    %668 = vmatprep.subr.bf16.mxu0 0
    %669 = vmatpush1.bf16.msra.mxu0 %v446
    %670 = vmatprep.subr.bf16.mxu0 0
    %671 = vmatpush1.bf16.msra.mxu0 %v449
    %672 = vmatprep.subr.bf16.mxu0 0
    %673 = vmatpush1.bf16.msra.mxu0 %v452
    %674 = vmatprep.subr.bf16.mxu0 0
    %675 = vmatpush1.bf16.msra.mxu0 %v455
    %676 = vmatprep.subr.bf16.mxu0 0
    %677 = vmatpush1.bf16.msra.mxu0 %v458
    %678 = vmatprep.subr.bf16.mxu0 0
    %679 = vmatpush1.bf16.msra.mxu0 %v461
    %680 = vmatprep.subr.bf16.mxu0 0
    %681 = vmatpush1.bf16.msra.mxu0 %v464
    %682 = vmatprep.subr.bf16.mxu0 0
    %683 = vmatpush1.bf16.msra.mxu0 %v467
    %684 = vmatprep.subr.bf16.mxu0 0
    %685 = vmatpush1.bf16.msra.mxu0 %v470
    %686 = vmatprep.subr.bf16.mxu0 0
    %687 = vmatpush1.bf16.msra.mxu0 %v473
    %688 = vmatprep.subr.bf16.mxu0 0
    %689 = vmatpush1.bf16.msra.mxu0 %v476
    %690 = vmatprep.subr.bf16.mxu0 0
    %691 = vmatpush1.bf16.msra.mxu0 %v479
    %692 = vmatprep.subr.bf16.mxu0 0
    %693 = vmatpush1.bf16.msra.mxu0 %v482
    %694 = vmatprep.subr.bf16.mxu0 0
    %695 = vmatpush1.bf16.msra.mxu0 %v485
    %696 = vmatprep.mubr.bf16.mxu0 %v94
    %697 = vmatmul.mubr.bf16.gmra.mrb[0].mxu0 %v93
    %v698 = vpop.f32.mrb[0].mxu0
    %v699 = vadd.f32 0.0, %v698
    %v700 = vpop.f32.mrb[0].mxu0
    %v701 = vpop.f32.mrb[0].mxu0
    %v702 = vpop.f32.mrb[0].mxu0
    %703 = vdwg.mxu0
    %704 = vmatprep.subr.bf16.mxu0 0
    %705 = vmatpush1.bf16.msra.mxu0 %v488
    %706 = vmatprep.subr.bf16.mxu0 0
    %707 = vmatpush1.bf16.msra.mxu0 %v491
    %708 = vmatprep.subr.bf16.mxu0 0
    %709 = vmatpush1.bf16.msra.mxu0 %v494
    %710 = vmatprep.subr.bf16.mxu0 0
    %711 = vmatpush1.bf16.msra.mxu0 %v497
    %712 = vmatprep.subr.bf16.mxu0 0
    %713 = vmatpush1.bf16.msra.mxu0 %v500
    %714 = vmatprep.subr.bf16.mxu0 0
    %715 = vmatpush1.bf16.msra.mxu0 %v503
    %716 = vmatprep.subr.bf16.mxu0 0
    %717 = vmatpush1.bf16.msra.mxu0 %v506
    %718 = vmatprep.subr.bf16.mxu0 0
    %719 = vmatpush1.bf16.msra.mxu0 %v509
    %720 = vmatprep.subr.bf16.mxu0 0
    %721 = vmatpush1.bf16.msra.mxu0 0
    %722 = vmatprep.subr.bf16.mxu0 0
    %723 = vmatpush1.bf16.msra.mxu0 0
    %724 = vmatprep.subr.bf16.mxu0 0
    %725 = vmatpush1.bf16.msra.mxu0 0
    %726 = vmatprep.subr.bf16.mxu0 0
    %727 = vmatpush1.bf16.msra.mxu0 0
    %728 = vmatprep.subr.bf16.mxu0 0
    %729 = vmatpush1.bf16.msra.mxu0 0
    %730 = vmatprep.subr.bf16.mxu0 0
    %731 = vmatpush1.bf16.msra.mxu0 0
    %732 = vmatprep.subr.bf16.mxu0 0
    %733 = vmatpush1.bf16.msra.mxu0 0
    %734 = vmatprep.subr.bf16.mxu0 0
    %735 = vmatpush1.bf16.msra.mxu0 0
    %736 = vmatprep.mubr.bf16.mxu0 0
    %737 = vmatmul.mubr.bf16.gmra.mrb[0].mxu0 %v95
    %v738 = vpop.f32.mrb[0].mxu0
    %v739 = vadd.f32 %v699, %v738
    %v740 = vpop.f32.mrb[0].mxu0
    %v741 = vpop.f32.mrb[0].mxu0
    %v742 = vpop.f32.mrb[0].mxu0
    %743 = vdwg.mxu0
    %v744 = vld [vmem:[#allocation5] sm:$0xff]
    %v745 = vld [vmem:[#allocation5 + $0x8] sm:$0xf]
    %v746 = vld [vmem:[#allocation5 + $0xc] sm:$0xff]
    %v747 = vld [vmem:[#allocation5 + $0x14] sm:$0xf]
    %v748 = vld [vmem:[#allocation5 + $0x18] sm:$0xff]
    %v749 = vld [vmem:[#allocation5 + $0x20] sm:$0xf]
    %v750 = vld [vmem:[#allocation5 + $0x24] sm:$0xff]
    %v751 = vld [vmem:[#allocation5 + $0x2c] sm:$0xf]
    %v752 = vld [vmem:[#allocation5 + $0x30] sm:$0xff]
    %v753 = vld [vmem:[#allocation5 + $0x38] sm:$0xf]
    %v754 = vld [vmem:[#allocation5 + $0x3c] sm:$0xff]
    %v755 = vld [vmem:[#allocation5 + $0x44] sm:$0xf]
    %v756 = vld [vmem:[#allocation5 + $0x48] sm:$0xff]
    %v757 = vld [vmem:[#allocation5 + $0x50] sm:$0xf]
    %v758 = vld [vmem:[#allocation5 + $0x54] sm:$0xff]
    %v759 = vld [vmem:[#allocation5 + $0x5c] sm:$0xf]
    %v760 = vld [vmem:[#allocation5 + $0x60] sm:$0xff]
    %v761 = vld [vmem:[#allocation5 + $0x68] sm:$0xf]
    %v762 = vld [vmem:[#allocation5 + $0x6c] sm:$0xff]
    %v763 = vld [vmem:[#allocation5 + $0x74] sm:$0xf]
    %v764 = vld [vmem:[#allocation5 + $0x78] sm:$0xff]
    %v765 = vld [vmem:[#allocation5 + $0x80] sm:$0xf]
    %v766 = vld [vmem:[#allocation5 + $0x84] sm:$0xff]
    %v767 = vld [vmem:[#allocation5 + $0x8c] sm:$0xf]
    %v768 = vld [vmem:[#allocation5 + $0x90] sm:$0xff]
    %v769 = vld [vmem:[#allocation5 + $0x98] sm:$0xf]
    %v770 = vld [vmem:[#allocation5 + $0x9c] sm:$0xff]
    %v771 = vld [vmem:[#allocation5 + $0xa4] sm:$0xf]
    %v772 = vld [vmem:[#allocation5 + $0xa8] sm:$0xff]
    %v773 = vld [vmem:[#allocation5 + $0xb0] sm:$0xf]
    %v774 = vld [vmem:[#allocation5 + $0xb4] sm:$0xff]
    %v775 = vld [vmem:[#allocation5 + $0xbc] sm:$0xf]
    %v776 = vld [vmem:[#allocation5 + $0xc0] sm:$0xff]
    %v777 = vld [vmem:[#allocation5 + $0xc8] sm:$0xf]
    %v778 = vld [vmem:[#allocation5 + $0xcc] sm:$0xff]
    %v779 = vld [vmem:[#allocation5 + $0xd4] sm:$0xf]
    %v780 = vld [vmem:[#allocation5 + $0xd8] sm:$0xff]
    %v781 = vld [vmem:[#allocation5 + $0xe0] sm:$0xf]
    %v782 = vld [vmem:[#allocation5 + $0xe4] sm:$0xff]
    %v783 = vld [vmem:[#allocation5 + $0xec] sm:$0xf]
    %v784 = vld [vmem:[#allocation5 + $0xf0] sm:$0xff]
    %v785 = vld [vmem:[#allocation5 + $0xf8] sm:$0xf]
    %v786 = vld [vmem:[#allocation5 + $0xfc] sm:$0xff]
    %v787 = vld [vmem:[#allocation5 + $0x104] sm:$0xf]
    %v788 = vld [vmem:[#allocation5 + $0x108] sm:$0xff]
    %v789 = vld [vmem:[#allocation5 + $0x110] sm:$0xf]
    %v790 = vld [vmem:[#allocation5 + $0x114] sm:$0xff]
    %v791 = vld [vmem:[#allocation5 + $0x11c] sm:$0xf]
    %v792 = vld [vmem:[#allocation5 + $0x120] sm:$0xff]
    %v793 = vld [vmem:[#allocation5 + $0x128] sm:$0xf]
    %v794 = vld [vmem:[#allocation5 + $0x12c] sm:$0xff]
    %v795 = vld [vmem:[#allocation5 + $0x134] sm:$0xf]
    %v796 = vld [vmem:[#allocation5 + $0x138] sm:$0xff]
    %v797 = vld [vmem:[#allocation5 + $0x140] sm:$0xf]
    %v798 = vld [vmem:[#allocation5 + $0x144] sm:$0xff]
    %v799 = vld [vmem:[#allocation5 + $0x14c] sm:$0xf]
    %v800 = vld [vmem:[#allocation5 + $0x150] sm:$0xff]
    %v801 = vld [vmem:[#allocation5 + $0x158] sm:$0xf]
    %v802 = vld [vmem:[#allocation5 + $0x15c] sm:$0xff]
    %v803 = vld [vmem:[#allocation5 + $0x164] sm:$0xf]
    %v804 = vld [vmem:[#allocation5 + $0x168] sm:$0xff]
    %v805 = vld [vmem:[#allocation5 + $0x170] sm:$0xf]
    %v806 = vld [vmem:[#allocation5 + $0x174] sm:$0xff]
    %v807 = vld [vmem:[#allocation5 + $0x17c] sm:$0xf]
    %v808 = vld [vmem:[#allocation5 + $0x180] sm:$0xff]
    %v809 = vld [vmem:[#allocation5 + $0x188] sm:$0xf]
    %v810 = vld [vmem:[#allocation5 + $0x18c] sm:$0xff]
    %v811 = vld [vmem:[#allocation5 + $0x194] sm:$0xf]
    %v812 = vld [vmem:[#allocation5 + $0x198] sm:$0xff]
    %v813 = vld [vmem:[#allocation5 + $0x1a0] sm:$0xf]
    %v814 = vld [vmem:[#allocation5 + $0x1a4] sm:$0xff]
    %v815 = vld [vmem:[#allocation5 + $0x1ac] sm:$0xf]
    %v816 = vld [vmem:[#allocation5 + $0x1b0] sm:$0xff]
    %v817 = vld [vmem:[#allocation5 + $0x1b8] sm:$0xf]
    %v818 = vld [vmem:[#allocation5 + $0x1bc] sm:$0xff]
    %v819 = vld [vmem:[#allocation5 + $0x1c4] sm:$0xf]
    %v820 = vld [vmem:[#allocation5 + $0x1c8] sm:$0xff]
    %v821 = vld [vmem:[#allocation5 + $0x1d0] sm:$0xf]
    %v822 = vld [vmem:[#allocation5 + $0x1d4] sm:$0xff]
    %v823 = vld [vmem:[#allocation5 + $0x1dc] sm:$0xf]
    %v824 = vld [vmem:[#allocation5 + $0x1e0] sm:$0xff]
    %v825 = vld [vmem:[#allocation5 + $0x1e8] sm:$0xf]
    %v826 = vld [vmem:[#allocation5 + $0x1ec] sm:$0xff]
    %v827 = vld [vmem:[#allocation5 + $0x1f4] sm:$0xf]
    %v828 = vld [vmem:[#allocation5 + $0x1f8] sm:$0xff]
    %v829 = vld [vmem:[#allocation5 + $0x200] sm:$0xf]
    %v830 = vld [vmem:[#allocation5 + $0x204] sm:$0xff]
    %v831 = vld [vmem:[#allocation5 + $0x20c] sm:$0xf]
    %v832 = vld [vmem:[#allocation5 + $0x210] sm:$0xff]
    %v833 = vld [vmem:[#allocation5 + $0x218] sm:$0xf]
    %v834 = vld [vmem:[#allocation5 + $0x21c] sm:$0xff]
    %v835 = vld [vmem:[#allocation5 + $0x224] sm:$0xf]
    %v836 = vld [vmem:[#allocation5 + $0x228] sm:$0xff]
    %v837 = vld [vmem:[#allocation5 + $0x230] sm:$0xf]
    %v838 = vld [vmem:[#allocation5 + $0x234] sm:$0xff]
    %v839 = vld [vmem:[#allocation5 + $0x23c] sm:$0xf]
    %v936 = vunpack.c.l.b16 %v744
    %v937 = vunpack.c.h.b16 %v744
    %v938 = vunpack.c.l.b16 %v745
    %v939 = vunpack.c.l.b16 %v746
    %v940 = vunpack.c.h.b16 %v746
    %v941 = vunpack.c.l.b16 %v747
    %v942 = vunpack.c.l.b16 %v748
    %v943 = vunpack.c.h.b16 %v748
    %v944 = vunpack.c.l.b16 %v749
    %v945 = vunpack.c.l.b16 %v750
    %v946 = vunpack.c.h.b16 %v750
    %v947 = vunpack.c.l.b16 %v751
    %v948 = vunpack.c.l.b16 %v752
    %v949 = vunpack.c.h.b16 %v752
    %v950 = vunpack.c.l.b16 %v753
    %v951 = vunpack.c.l.b16 %v754
    %v952 = vunpack.c.h.b16 %v754
    %v953 = vunpack.c.l.b16 %v755
    %v954 = vunpack.c.l.b16 %v756
    %v955 = vunpack.c.h.b16 %v756
    %v956 = vunpack.c.l.b16 %v757
    %v957 = vunpack.c.l.b16 %v758
    %v958 = vunpack.c.h.b16 %v758
    %v959 = vunpack.c.l.b16 %v759
    %v960 = vunpack.c.l.b16 %v760
    %v961 = vunpack.c.h.b16 %v760
    %v962 = vunpack.c.l.b16 %v761
    %v963 = vunpack.c.l.b16 %v762
    %v964 = vunpack.c.h.b16 %v762
    %v965 = vunpack.c.l.b16 %v763
    %v966 = vunpack.c.l.b16 %v764
    %v967 = vunpack.c.h.b16 %v764
    %v968 = vunpack.c.l.b16 %v765
    %v969 = vunpack.c.l.b16 %v766
    %v970 = vunpack.c.h.b16 %v766
    %v971 = vunpack.c.l.b16 %v767
    %v972 = vunpack.c.l.b16 %v768
    %v973 = vunpack.c.h.b16 %v768
    %v974 = vunpack.c.l.b16 %v769
    %v975 = vunpack.c.l.b16 %v770
    %v976 = vunpack.c.h.b16 %v770
    %v977 = vunpack.c.l.b16 %v771
    %v978 = vunpack.c.l.b16 %v772
    %v979 = vunpack.c.h.b16 %v772
    %v980 = vunpack.c.l.b16 %v773
    %v981 = vunpack.c.l.b16 %v774
    %v982 = vunpack.c.h.b16 %v774
    %v983 = vunpack.c.l.b16 %v775
    %v984 = vunpack.c.l.b16 %v776
    %v985 = vunpack.c.h.b16 %v776
    %v986 = vunpack.c.l.b16 %v777
    %v987 = vunpack.c.l.b16 %v778
    %v988 = vunpack.c.h.b16 %v778
    %v989 = vunpack.c.l.b16 %v779
    %v990 = vunpack.c.l.b16 %v780
    %v991 = vunpack.c.h.b16 %v780
    %v992 = vunpack.c.l.b16 %v781
    %v993 = vunpack.c.l.b16 %v782
    %v994 = vunpack.c.h.b16 %v782
    %v995 = vunpack.c.l.b16 %v783
    %v996 = vunpack.c.l.b16 %v784
    %v997 = vunpack.c.h.b16 %v784
    %v998 = vunpack.c.l.b16 %v785
    %v999 = vunpack.c.l.b16 %v786
    %v1000 = vunpack.c.h.b16 %v786
    %v1001 = vunpack.c.l.b16 %v787
    %v1002 = vunpack.c.l.b16 %v788
    %v1003 = vunpack.c.h.b16 %v788
    %v1004 = vunpack.c.l.b16 %v789
    %v1005 = vunpack.c.l.b16 %v790
    %v1006 = vunpack.c.h.b16 %v790
    %v1007 = vunpack.c.l.b16 %v791
    %v1008 = vunpack.c.l.b16 %v792
    %v1009 = vunpack.c.h.b16 %v792
    %v1010 = vunpack.c.l.b16 %v793
    %v1011 = vunpack.c.l.b16 %v794
    %v1012 = vunpack.c.h.b16 %v794
    %v1013 = vunpack.c.l.b16 %v795
    %v1014 = vunpack.c.l.b16 %v796
    %v1015 = vunpack.c.h.b16 %v796
    %v1016 = vunpack.c.l.b16 %v797
    %v1017 = vunpack.c.l.b16 %v798
    %v1018 = vunpack.c.h.b16 %v798
    %v1019 = vunpack.c.l.b16 %v799
    %v1020 = vunpack.c.l.b16 %v800
    %v1021 = vunpack.c.h.b16 %v800
    %v1022 = vunpack.c.l.b16 %v801
    %v1023 = vunpack.c.l.b16 %v802
    %v1024 = vunpack.c.h.b16 %v802
    %v1025 = vunpack.c.l.b16 %v803
    %v1026 = vunpack.c.l.b16 %v804
    %v1027 = vunpack.c.h.b16 %v804
    %v1028 = vunpack.c.l.b16 %v805
    %v1029 = vunpack.c.l.b16 %v806
    %v1030 = vunpack.c.h.b16 %v806
    %v1031 = vunpack.c.l.b16 %v807
    %v1032 = vunpack.c.l.b16 %v808
    %v1033 = vunpack.c.h.b16 %v808
    %v1034 = vunpack.c.l.b16 %v809
    %v1035 = vunpack.c.l.b16 %v810
    %v1036 = vunpack.c.h.b16 %v810
    %v1037 = vunpack.c.l.b16 %v811
    %v1038 = vunpack.c.l.b16 %v812
    %v1039 = vunpack.c.h.b16 %v812
    %v1040 = vunpack.c.l.b16 %v813
    %v1041 = vunpack.c.l.b16 %v814
    %v1042 = vunpack.c.h.b16 %v814
    %v1043 = vunpack.c.l.b16 %v815
    %v1044 = vunpack.c.l.b16 %v816
    %v1045 = vunpack.c.h.b16 %v816
    %v1046 = vunpack.c.l.b16 %v817
    %v1047 = vunpack.c.l.b16 %v818
    %v1048 = vunpack.c.h.b16 %v818
    %v1049 = vunpack.c.l.b16 %v819
    %v1050 = vunpack.c.l.b16 %v820
    %v1051 = vunpack.c.h.b16 %v820
    %v1052 = vunpack.c.l.b16 %v821
    %v1053 = vunpack.c.l.b16 %v822
    %v1054 = vunpack.c.h.b16 %v822
    %v1055 = vunpack.c.l.b16 %v823
    %v1056 = vunpack.c.l.b16 %v824
    %v1057 = vunpack.c.h.b16 %v824
    %v1058 = vunpack.c.l.b16 %v825
    %v1059 = vunpack.c.l.b16 %v826
    %v1060 = vunpack.c.h.b16 %v826
    %v1061 = vunpack.c.l.b16 %v827
    %v1062 = vunpack.c.l.b16 %v828
    %v1063 = vunpack.c.h.b16 %v828
    %v1064 = vunpack.c.l.b16 %v829
    %v1065 = vunpack.c.l.b16 %v830
    %v1066 = vunpack.c.h.b16 %v830
    %v1067 = vunpack.c.l.b16 %v831
    %v1068 = vunpack.c.l.b16 %v832
    %v1069 = vunpack.c.h.b16 %v832
    %v1070 = vunpack.c.l.b16 %v833
    %v1071 = vunpack.c.l.b16 %v834
    %v1072 = vunpack.c.h.b16 %v834
    %v1073 = vunpack.c.l.b16 %v835
    %v1074 = vunpack.c.l.b16 %v836
    %v1075 = vunpack.c.h.b16 %v836
    %v1076 = vunpack.c.l.b16 %v837
    %v1077 = vunpack.c.l.b16 %v838
    %v1078 = vunpack.c.h.b16 %v838
    %v1079 = vunpack.c.l.b16 %v839
    %v1080 = vpack.c.b16 %v939, %v936
    %v1081 = vpack.c.b16 %v940, %v937
    %v1082 = vpack.c.b16 %v941, %v938
    %v1083 = vpack.c.b16 %v945, %v942
    %v1084 = vpack.c.b16 %v946, %v943
    %v1085 = vpack.c.b16 %v947, %v944
    %v1086 = vpack.c.b16 %v951, %v948
    %v1087 = vpack.c.b16 %v952, %v949
    %v1088 = vpack.c.b16 %v953, %v950
    %v1089 = vpack.c.b16 %v957, %v954
    %v1090 = vpack.c.b16 %v958, %v955
    %v1091 = vpack.c.b16 %v959, %v956
    %v1092 = vpack.c.b16 %v963, %v960
    %v1093 = vpack.c.b16 %v964, %v961
    %v1094 = vpack.c.b16 %v965, %v962
    %v1095 = vpack.c.b16 %v969, %v966
    %v1096 = vpack.c.b16 %v970, %v967
    %v1097 = vpack.c.b16 %v971, %v968
    %v1098 = vpack.c.b16 %v975, %v972
    %v1099 = vpack.c.b16 %v976, %v973
    %v1100 = vpack.c.b16 %v977, %v974
    %v1101 = vpack.c.b16 %v981, %v978
    %v1102 = vpack.c.b16 %v982, %v979
    %v1103 = vpack.c.b16 %v983, %v980
    %v1104 = vpack.c.b16 %v987, %v984
    %v1105 = vpack.c.b16 %v988, %v985
    %v1106 = vpack.c.b16 %v989, %v986
    %v1107 = vpack.c.b16 %v993, %v990
    %v1108 = vpack.c.b16 %v994, %v991
    %v1109 = vpack.c.b16 %v995, %v992
    %v1110 = vpack.c.b16 %v999, %v996
    %v1111 = vpack.c.b16 %v1000, %v997
    %v1112 = vpack.c.b16 %v1001, %v998
    %v1113 = vpack.c.b16 %v1005, %v1002
    %v1114 = vpack.c.b16 %v1006, %v1003
    %v1115 = vpack.c.b16 %v1007, %v1004
    %v1116 = vpack.c.b16 %v1011, %v1008
    %v1117 = vpack.c.b16 %v1012, %v1009
    %v1118 = vpack.c.b16 %v1013, %v1010
    %v1119 = vpack.c.b16 %v1017, %v1014
    %v1120 = vpack.c.b16 %v1018, %v1015
    %v1121 = vpack.c.b16 %v1019, %v1016
    %v1122 = vpack.c.b16 %v1023, %v1020
    %v1123 = vpack.c.b16 %v1024, %v1021
    %v1124 = vpack.c.b16 %v1025, %v1022
    %v1125 = vpack.c.b16 %v1029, %v1026
    %v1126 = vpack.c.b16 %v1030, %v1027
    %v1127 = vpack.c.b16 %v1031, %v1028
    %v1128 = vpack.c.b16 %v1035, %v1032
    %v1129 = vpack.c.b16 %v1036, %v1033
    %v1130 = vpack.c.b16 %v1037, %v1034
    %v1131 = vpack.c.b16 %v1041, %v1038
    %v1132 = vpack.c.b16 %v1042, %v1039
    %v1133 = vpack.c.b16 %v1043, %v1040
    %v1134 = vpack.c.b16 %v1047, %v1044
    %v1135 = vpack.c.b16 %v1048, %v1045
    %v1136 = vpack.c.b16 %v1049, %v1046
    %v1137 = vpack.c.b16 %v1053, %v1050
    %v1138 = vpack.c.b16 %v1054, %v1051
    %v1139 = vpack.c.b16 %v1055, %v1052
    %v1140 = vpack.c.b16 %v1059, %v1056
    %v1141 = vpack.c.b16 %v1060, %v1057
    %v1142 = vpack.c.b16 %v1061, %v1058
    %v1143 = vpack.c.b16 %v1065, %v1062
    %v1144 = vpack.c.b16 %v1066, %v1063
    %v1145 = vpack.c.b16 %v1067, %v1064
    %v1146 = vpack.c.b16 %v1071, %v1068
    %v1147 = vpack.c.b16 %v1072, %v1069
    %v1148 = vpack.c.b16 %v1073, %v1070
    %v1149 = vpack.c.b16 %v1077, %v1074
    %v1150 = vpack.c.b16 %v1078, %v1075
    %v1151 = vpack.c.b16 %v1079, %v1076
    %1224 = vmatprep.subr.bf16.mxu0 %v1081
    %1225 = vmatpush1.bf16.msra.mxu0 %v1080
    %1226 = vmatprep.subr.bf16.mxu0 %v1084
    %1227 = vmatpush1.bf16.msra.mxu0 %v1083
    %1228 = vmatprep.subr.bf16.mxu0 %v1087
    %1229 = vmatpush1.bf16.msra.mxu0 %v1086
    %1230 = vmatprep.subr.bf16.mxu0 %v1090
    %1231 = vmatpush1.bf16.msra.mxu0 %v1089
    %1232 = vmatprep.subr.bf16.mxu0 %v1093
    %1233 = vmatpush1.bf16.msra.mxu0 %v1092
    %1234 = vmatprep.subr.bf16.mxu0 %v1096
    %1235 = vmatpush1.bf16.msra.mxu0 %v1095
    %1236 = vmatprep.subr.bf16.mxu0 %v1099
    %1237 = vmatpush1.bf16.msra.mxu0 %v1098
    %1238 = vmatprep.subr.bf16.mxu0 %v1102
    %1239 = vmatpush1.bf16.msra.mxu0 %v1101
    %1240 = vmatprep.subr.bf16.mxu0 %v1105
    %1241 = vmatpush1.bf16.msra.mxu0 %v1104
    %1242 = vmatprep.subr.bf16.mxu0 %v1108
    %1243 = vmatpush1.bf16.msra.mxu0 %v1107
    %1244 = vmatprep.subr.bf16.mxu0 %v1111
    %1245 = vmatpush1.bf16.msra.mxu0 %v1110
    %1246 = vmatprep.subr.bf16.mxu0 %v1114
    %1247 = vmatpush1.bf16.msra.mxu0 %v1113
    %1248 = vmatprep.subr.bf16.mxu0 %v1117
    %1249 = vmatpush1.bf16.msra.mxu0 %v1116
    %1250 = vmatprep.subr.bf16.mxu0 %v1120
    %1251 = vmatpush1.bf16.msra.mxu0 %v1119
    %1252 = vmatprep.subr.bf16.mxu0 %v1123
    %1253 = vmatpush1.bf16.msra.mxu0 %v1122
    %1254 = vmatprep.subr.bf16.mxu0 %v1126
    %1255 = vmatpush1.bf16.msra.mxu0 %v1125
    %1256 = vmatprep.mubr.bf16.mxu0 %v100
    %1257 = vmatmul.mubr.bf16.gmra.mrb[0].mxu0 %v99
    %v1258 = vpop.f32.mrb[0].mxu0
    %v1259 = vadd.f32 0.0, %v1258
    %v1260 = vpop.f32.mrb[0].mxu0
    %v1261 = vadd.f32 0.0, %v1260
    %v1262 = vpop.f32.mrb[0].mxu0
    %v1263 = vpop.f32.mrb[0].mxu0
    %1264 = vdwg.mxu0
    %1265 = vmatprep.subr.bf16.mxu0 %v1129
    %1266 = vmatpush1.bf16.msra.mxu0 %v1128
    %1267 = vmatprep.subr.bf16.mxu0 %v1132
    %1268 = vmatpush1.bf16.msra.mxu0 %v1131
    %1269 = vmatprep.subr.bf16.mxu0 %v1135
    %1270 = vmatpush1.bf16.msra.mxu0 %v1134
    %1271 = vmatprep.subr.bf16.mxu0 %v1138
    %1272 = vmatpush1.bf16.msra.mxu0 %v1137
    %1273 = vmatprep.subr.bf16.mxu0 %v1141
    %1274 = vmatpush1.bf16.msra.mxu0 %v1140
    %1275 = vmatprep.subr.bf16.mxu0 %v1144
    %1276 = vmatpush1.bf16.msra.mxu0 %v1143
    %1277 = vmatprep.subr.bf16.mxu0 %v1147
    %1278 = vmatpush1.bf16.msra.mxu0 %v1146
    %1279 = vmatprep.subr.bf16.mxu0 %v1150
    %1280 = vmatpush1.bf16.msra.mxu0 %v1149
    %1281 = vmatprep.subr.bf16.mxu0 0
    %1282 = vmatpush1.bf16.msra.mxu0 0
    %1283 = vmatprep.subr.bf16.mxu0 0
    %1284 = vmatpush1.bf16.msra.mxu0 0
    %1285 = vmatprep.subr.bf16.mxu0 0
    %1286 = vmatpush1.bf16.msra.mxu0 0
    %1287 = vmatprep.subr.bf16.mxu0 0
    %1288 = vmatpush1.bf16.msra.mxu0 0
    %1289 = vmatprep.subr.bf16.mxu0 0
    %1290 = vmatpush1.bf16.msra.mxu0 0
    %1291 = vmatprep.subr.bf16.mxu0 0
    %1292 = vmatpush1.bf16.msra.mxu0 0
    %1293 = vmatprep.subr.bf16.mxu0 0
    %1294 = vmatpush1.bf16.msra.mxu0 0
    %1295 = vmatprep.subr.bf16.mxu0 0
    %1296 = vmatpush1.bf16.msra.mxu0 0
    %1297 = vmatprep.mubr.bf16.mxu0 0
    %1298 = vmatmul.mubr.bf16.gmra.mrb[0].mxu0 %v101
    %v1299 = vpop.f32.mrb[0].mxu0
    %v1300 = vadd.f32 %v1259, %v1299
    %v1301 = vpop.f32.mrb[0].mxu0
    %v1302 = vadd.f32 %v1261, %v1301
    %v1303 = vpop.f32.mrb[0].mxu0
    %v1304 = vpop.f32.mrb[0].mxu0
    %1305 = vdwg.mxu0
    %1306 = vmatprep.subr.bf16.mxu0 0
    %1307 = vmatpush1.bf16.msra.mxu0 %v1082
    %1308 = vmatprep.subr.bf16.mxu0 0
    %1309 = vmatpush1.bf16.msra.mxu0 %v1085
    %1310 = vmatprep.subr.bf16.mxu0 0
    %1311 = vmatpush1.bf16.msra.mxu0 %v1088
    %1312 = vmatprep.subr.bf16.mxu0 0
    %1313 = vmatpush1.bf16.msra.mxu0 %v1091
    %1314 = vmatprep.subr.bf16.mxu0 0
    %1315 = vmatpush1.bf16.msra.mxu0 %v1094
    %1316 = vmatprep.subr.bf16.mxu0 0
    %1317 = vmatpush1.bf16.msra.mxu0 %v1097
    %1318 = vmatprep.subr.bf16.mxu0 0
    %1319 = vmatpush1.bf16.msra.mxu0 %v1100
    %1320 = vmatprep.subr.bf16.mxu0 0
    %1321 = vmatpush1.bf16.msra.mxu0 %v1103
    %1322 = vmatprep.subr.bf16.mxu0 0
    %1323 = vmatpush1.bf16.msra.mxu0 %v1106
    %1324 = vmatprep.subr.bf16.mxu0 0
    %1325 = vmatpush1.bf16.msra.mxu0 %v1109
    %1326 = vmatprep.subr.bf16.mxu0 0
    %1327 = vmatpush1.bf16.msra.mxu0 %v1112
    %1328 = vmatprep.subr.bf16.mxu0 0
    %1329 = vmatpush1.bf16.msra.mxu0 %v1115
    %1330 = vmatprep.subr.bf16.mxu0 0
    %1331 = vmatpush1.bf16.msra.mxu0 %v1118
    %1332 = vmatprep.subr.bf16.mxu0 0
    %1333 = vmatpush1.bf16.msra.mxu0 %v1121
    %1334 = vmatprep.subr.bf16.mxu0 0
    %1335 = vmatpush1.bf16.msra.mxu0 %v1124
    %1336 = vmatprep.subr.bf16.mxu0 0
    %1337 = vmatpush1.bf16.msra.mxu0 %v1127
    %1338 = vmatprep.mubr.bf16.mxu0 %v100
    %1339 = vmatmul.mubr.bf16.gmra.mrb[0].mxu0 %v99
    %v1340 = vpop.f32.mrb[0].mxu0
    %v1341 = vadd.f32 0.0, %v1340
    %v1342 = vpop.f32.mrb[0].mxu0
    %v1343 = vpop.f32.mrb[0].mxu0
    %v1344 = vpop.f32.mrb[0].mxu0
    %1345 = vdwg.mxu0
    %1346 = vmatprep.subr.bf16.mxu0 0
    %1347 = vmatpush1.bf16.msra.mxu0 %v1130
    %1348 = vmatprep.subr.bf16.mxu0 0
    %1349 = vmatpush1.bf16.msra.mxu0 %v1133
    %1350 = vmatprep.subr.bf16.mxu0 0
    %1351 = vmatpush1.bf16.msra.mxu0 %v1136
    %1352 = vmatprep.subr.bf16.mxu0 0
    %1353 = vmatpush1.bf16.msra.mxu0 %v1139
    %1354 = vmatprep.subr.bf16.mxu0 0
    %1355 = vmatpush1.bf16.msra.mxu0 %v1142
    %1356 = vmatprep.subr.bf16.mxu0 0
    %1357 = vmatpush1.bf16.msra.mxu0 %v1145
    %1358 = vmatprep.subr.bf16.mxu0 0
    %1359 = vmatpush1.bf16.msra.mxu0 %v1148
    %1360 = vmatprep.subr.bf16.mxu0 0
    %1361 = vmatpush1.bf16.msra.mxu0 %v1151
    %1362 = vmatprep.subr.bf16.mxu0 0
    %1363 = vmatpush1.bf16.msra.mxu0 0
    %1364 = vmatprep.subr.bf16.mxu0 0
    %1365 = vmatpush1.bf16.msra.mxu0 0
    %1366 = vmatprep.subr.bf16.mxu0 0
    %1367 = vmatpush1.bf16.msra.mxu0 0
    %1368 = vmatprep.subr.bf16.mxu0 0
    %1369 = vmatpush1.bf16.msra.mxu0 0
    %1370 = vmatprep.subr.bf16.mxu0 0
    %1371 = vmatpush1.bf16.msra.mxu0 0
    %1372 = vmatprep.subr.bf16.mxu0 0
    %1373 = vmatpush1.bf16.msra.mxu0 0
    %1374 = vmatprep.subr.bf16.mxu0 0
    %1375 = vmatpush1.bf16.msra.mxu0 0
    %1376 = vmatprep.subr.bf16.mxu0 0
    %1377 = vmatpush1.bf16.msra.mxu0 0
    %1378 = vmatprep.mubr.bf16.mxu0 0
    %1379 = vmatmul.mubr.bf16.gmra.mrb[0].mxu0 %v101
    %v1380 = vpop.f32.mrb[0].mxu0
    %v1381 = vadd.f32 %v1341, %v1380
    %v1382 = vpop.f32.mrb[0].mxu0
    %v1383 = vpop.f32.mrb[0].mxu0
    %v1384 = vpop.f32.mrb[0].mxu0
    %1385 = vdwg.mxu0
    %v1386 = vld [vmem:[%s4] sm:$0x1]
    %v1388 = vlaneseq
    %v1389 = vshrl.u32 %v1388, 7
    %v1390 = vsub.s32 0, %v1389
    %v1391 = vrot.slane %v1386, %v1390
    %v1393 = vadd.f32 %v658, %v1391
    %v1394 = vmax.f32 %v1393, 0.0
    %v1395 = vld [vmem:[%s5] sm:$0x1]
    %v1397 = vlaneseq
    %v1398 = vshrl.u32 %v1397, 7
    %v1399 = vsub.s32 0, %v1398
    %v1400 = vrot.slane %v1395, %v1399
    %v1402 = vadd.f32 %v1300, %v1400
    %v1403 = vmax.f32 %v1402, 0.0
    %v1404 = vadd.f32 %v660, %v1302
    %v1405 = vadd.f32 %v739, %v1381
    %v1406 = vld [vmem:[%s6] sm:$0x3]
    %v1408 = vlaneseq
    %v1409 = vshrl.u32 %v1408, 7
    %v1410 = vsub.s32 0, %v1409
    %v1411 = vrot.slane %v1406, %v1410
    %v1412 = vlaneseq
    %v1413 = vshrl.u32 %v1412, 7
    %v1414 = vsub.s32 1, %v1413
    %v1415 = vrot.slane %v1406, %v1414
    %v1418 = vadd.f32 %v1404, %v1411
    %v1419 = vadd.f32 %v1405, %v1415
    %v1420 = vmax.f32 %v1418, 0.0
    %v1421 = vmax.f32 %v1419, 0.0
    %v1422 = vpack.c.bf16 %v1394, %v1394
    %v1423 = vld [vmem:[%s7] sm:$0xf]
    %v1424 = vld [vmem:[%s7 + $0x4] sm:$0xf]
    %v1425 = vld [vmem:[%s7 + $0x8] sm:$0xf]
    %v1426 = vld [vmem:[%s7 + $0xc] sm:$0xf]
    %v1427 = vld [vmem:[%s7 + $0x10] sm:$0xf]
    %v1428 = vld [vmem:[%s7 + $0x14] sm:$0xf]
    %v1429 = vld [vmem:[%s7 + $0x18] sm:$0xf]
    %v1430 = vld [vmem:[%s7 + $0x1c] sm:$0xf]
    %v1431 = vld [vmem:[%s7 + $0x20] sm:$0xf]
    %v1432 = vld [vmem:[%s7 + $0x24] sm:$0xf]
    %v1433 = vld [vmem:[%s7 + $0x28] sm:$0xf]
    %v1434 = vld [vmem:[%s7 + $0x2c] sm:$0xf]
    %v1435 = vld [vmem:[%s7 + $0x30] sm:$0xf]
    %v1436 = vld [vmem:[%s7 + $0x34] sm:$0xf]
    %v1437 = vld [vmem:[%s7 + $0x38] sm:$0xf]
    %v1438 = vld [vmem:[%s7 + $0x3c] sm:$0xf]
    %v1439 = vld [vmem:[%s8] sm:$0x1]
    %v1441 = vlaneseq
    %v1442 = vshrl.u32 %v1441, 7
    %v1443 = vsub.s32 0, %v1442
    %v1444 = vrot.slane %v1439, %v1443
    %v1462 = vunpack.c.l.b16 %v1423
    %v1463 = vunpack.c.l.b16 %v1424
    %v1464 = vunpack.c.l.b16 %v1425
    %v1465 = vunpack.c.l.b16 %v1426
    %v1466 = vunpack.c.l.b16 %v1427
    %v1467 = vunpack.c.l.b16 %v1428
    %v1468 = vunpack.c.l.b16 %v1429
    %v1469 = vunpack.c.l.b16 %v1430
    %v1470 = vunpack.c.l.b16 %v1431
    %v1471 = vunpack.c.l.b16 %v1432
    %v1472 = vunpack.c.l.b16 %v1433
    %v1473 = vunpack.c.l.b16 %v1434
    %v1474 = vunpack.c.l.b16 %v1435
    %v1475 = vunpack.c.l.b16 %v1436
    %v1476 = vunpack.c.l.b16 %v1437
    %v1477 = vunpack.c.l.b16 %v1438
    %v1478 = vpack.c.b16 %v1463, %v1462
    %v1479 = vpack.c.b16 %v1465, %v1464
    %v1480 = vpack.c.b16 %v1467, %v1466
    %v1481 = vpack.c.b16 %v1469, %v1468
    %v1482 = vpack.c.b16 %v1471, %v1470
    %v1483 = vpack.c.b16 %v1473, %v1472
    %v1484 = vpack.c.b16 %v1475, %v1474
    %v1485 = vpack.c.b16 %v1477, %v1476
    %1494 = vmatprep.subr.bf16.mxu0 0
    %1495 = vmatpush1.bf16.msra.mxu0 %v1478
    %1496 = vmatprep.subr.bf16.mxu0 0
    %1497 = vmatpush1.bf16.msra.mxu0 %v1479
    %1498 = vmatprep.subr.bf16.mxu0 0
    %1499 = vmatpush1.bf16.msra.mxu0 %v1480
    %1500 = vmatprep.subr.bf16.mxu0 0
    %1501 = vmatpush1.bf16.msra.mxu0 %v1481
    %1502 = vmatprep.subr.bf16.mxu0 0
    %1503 = vmatpush1.bf16.msra.mxu0 %v1482
    %1504 = vmatprep.subr.bf16.mxu0 0
    %1505 = vmatpush1.bf16.msra.mxu0 %v1483
    %1506 = vmatprep.subr.bf16.mxu0 0
    %1507 = vmatpush1.bf16.msra.mxu0 %v1484
    %1508 = vmatprep.subr.bf16.mxu0 0
    %1509 = vmatpush1.bf16.msra.mxu0 %v1485
    %1510 = vmatprep.subr.bf16.mxu0 0
    %1511 = vmatpush1.bf16.msra.mxu0 0
    %1512 = vmatprep.subr.bf16.mxu0 0
    %1513 = vmatpush1.bf16.msra.mxu0 0
    %1514 = vmatprep.subr.bf16.mxu0 0
    %1515 = vmatpush1.bf16.msra.mxu0 0
    %1516 = vmatprep.subr.bf16.mxu0 0
    %1517 = vmatpush1.bf16.msra.mxu0 0
    %1518 = vmatprep.subr.bf16.mxu0 0
    %1519 = vmatpush1.bf16.msra.mxu0 0
    %1520 = vmatprep.subr.bf16.mxu0 0
    %1521 = vmatpush1.bf16.msra.mxu0 0
    %1522 = vmatprep.subr.bf16.mxu0 0
    %1523 = vmatpush1.bf16.msra.mxu0 0
    %1524 = vmatprep.subr.bf16.mxu0 0
    %1525 = vmatpush1.bf16.msra.mxu0 0
    %1526 = vmatprep.mubr.bf16.mxu0 0
    %1527 = vmatmul.mubr.bf16.gmra.mrb[0].mxu0 %v1422
    %v1528 = vpop.f32.mrb[0].mxu0
    %v1529 = vadd.f32 %v1444, %v1528
    %v1530 = vpop.f32.mrb[0].mxu0
    %v1531 = vpop.f32.mrb[0].mxu0
    %v1532 = vpop.f32.mrb[0].mxu0
    %1533 = vdwg.mxu0
    %v1534 = vmax.f32 %v1529, 0.0
    %v1535 = vpack.c.bf16 %v1403, %v1403
    %v1536 = vld [vmem:[%s9] sm:$0xf]
    %v1537 = vld [vmem:[%s9 + $0x4] sm:$0xf]
    %v1538 = vld [vmem:[%s9 + $0x8] sm:$0xf]
    %v1539 = vld [vmem:[%s9 + $0xc] sm:$0xf]
    %v1540 = vld [vmem:[%s9 + $0x10] sm:$0xf]
    %v1541 = vld [vmem:[%s9 + $0x14] sm:$0xf]
    %v1542 = vld [vmem:[%s9 + $0x18] sm:$0xf]
    %v1543 = vld [vmem:[%s9 + $0x1c] sm:$0xf]
    %v1544 = vld [vmem:[%s9 + $0x20] sm:$0xf]
    %v1545 = vld [vmem:[%s9 + $0x24] sm:$0xf]
    %v1546 = vld [vmem:[%s9 + $0x28] sm:$0xf]
    %v1547 = vld [vmem:[%s9 + $0x2c] sm:$0xf]
    %v1548 = vld [vmem:[%s9 + $0x30] sm:$0xf]
    %v1549 = vld [vmem:[%s9 + $0x34] sm:$0xf]
    %v1550 = vld [vmem:[%s9 + $0x38] sm:$0xf]
    %v1551 = vld [vmem:[%s9 + $0x3c] sm:$0xf]
    %v1552 = vld [vmem:[%s10] sm:$0x1]
    %v1554 = vlaneseq
    %v1555 = vshrl.u32 %v1554, 7
    %v1556 = vsub.s32 0, %v1555
    %v1557 = vrot.slane %v1552, %v1556
    %v1575 = vunpack.c.l.b16 %v1536
    %v1576 = vunpack.c.l.b16 %v1537
    %v1577 = vunpack.c.l.b16 %v1538
    %v1578 = vunpack.c.l.b16 %v1539
    %v1579 = vunpack.c.l.b16 %v1540
    %v1580 = vunpack.c.l.b16 %v1541
    %v1581 = vunpack.c.l.b16 %v1542
    %v1582 = vunpack.c.l.b16 %v1543
    %v1583 = vunpack.c.l.b16 %v1544
    %v1584 = vunpack.c.l.b16 %v1545
    %v1585 = vunpack.c.l.b16 %v1546
    %v1586 = vunpack.c.l.b16 %v1547
    %v1587 = vunpack.c.l.b16 %v1548
    %v1588 = vunpack.c.l.b16 %v1549
    %v1589 = vunpack.c.l.b16 %v1550
    %v1590 = vunpack.c.l.b16 %v1551
    %v1591 = vpack.c.b16 %v1576, %v1575
    %v1592 = vpack.c.b16 %v1578, %v1577
    %v1593 = vpack.c.b16 %v1580, %v1579
    %v1594 = vpack.c.b16 %v1582, %v1581
    %v1595 = vpack.c.b16 %v1584, %v1583
    %v1596 = vpack.c.b16 %v1586, %v1585
    %v1597 = vpack.c.b16 %v1588, %v1587
    %v1598 = vpack.c.b16 %v1590, %v1589
    %1607 = vmatprep.subr.bf16.mxu0 0
    %1608 = vmatpush1.bf16.msra.mxu0 %v1591
    %1609 = vmatprep.subr.bf16.mxu0 0
    %1610 = vmatpush1.bf16.msra.mxu0 %v1592
    %1611 = vmatprep.subr.bf16.mxu0 0
    %1612 = vmatpush1.bf16.msra.mxu0 %v1593
    %1613 = vmatprep.subr.bf16.mxu0 0
    %1614 = vmatpush1.bf16.msra.mxu0 %v1594
    %1615 = vmatprep.subr.bf16.mxu0 0
    %1616 = vmatpush1.bf16.msra.mxu0 %v1595
    %1617 = vmatprep.subr.bf16.mxu0 0
    %1618 = vmatpush1.bf16.msra.mxu0 %v1596
    %1619 = vmatprep.subr.bf16.mxu0 0
    %1620 = vmatpush1.bf16.msra.mxu0 %v1597
    %1621 = vmatprep.subr.bf16.mxu0 0
    %1622 = vmatpush1.bf16.msra.mxu0 %v1598
    %1623 = vmatprep.subr.bf16.mxu0 0
    %1624 = vmatpush1.bf16.msra.mxu0 0
    %1625 = vmatprep.subr.bf16.mxu0 0
    %1626 = vmatpush1.bf16.msra.mxu0 0
    %1627 = vmatprep.subr.bf16.mxu0 0
    %1628 = vmatpush1.bf16.msra.mxu0 0
    %1629 = vmatprep.subr.bf16.mxu0 0
    %1630 = vmatpush1.bf16.msra.mxu0 0
    %1631 = vmatprep.subr.bf16.mxu0 0
    %1632 = vmatpush1.bf16.msra.mxu0 0
    %1633 = vmatprep.subr.bf16.mxu0 0
    %1634 = vmatpush1.bf16.msra.mxu0 0
    %1635 = vmatprep.subr.bf16.mxu0 0
    %1636 = vmatpush1.bf16.msra.mxu0 0
    %1637 = vmatprep.subr.bf16.mxu0 0
    %1638 = vmatpush1.bf16.msra.mxu0 0
    %1639 = vmatprep.mubr.bf16.mxu0 0
    %1640 = vmatmul.mubr.bf16.gmra.mrb[0].mxu0 %v1535
    %v1641 = vpop.f32.mrb[0].mxu0
    %v1642 = vadd.f32 %v1557, %v1641
    %v1643 = vpop.f32.mrb[0].mxu0
    %v1644 = vpop.f32.mrb[0].mxu0
    %v1645 = vpop.f32.mrb[0].mxu0
    %1646 = vdwg.mxu0
    %v1647 = vmax.f32 %v1642, 0.0
    %v1648 = vmul.f32 %v1534, %v1647
    %v1649 = vpack.c.bf16 %v1420, %v1420
    %v1650 = vpack.c.bf16 %v1421, %v1421
    %v1651 = vld [vmem:[%s11] sm:$0xf]
    %v1652 = vld [vmem:[%s11 + $0x4] sm:$0xf]
    %v1653 = vld [vmem:[%s11 + $0x8] sm:$0xf]
    %v1654 = vld [vmem:[%s11 + $0xc] sm:$0xf]
    %v1655 = vld [vmem:[%s11 + $0x10] sm:$0xf]
    %v1656 = vld [vmem:[%s11 + $0x14] sm:$0xf]
    %v1657 = vld [vmem:[%s11 + $0x18] sm:$0xf]
    %v1658 = vld [vmem:[%s11 + $0x1c] sm:$0xf]
    %v1659 = vld [vmem:[%s11 + $0x20] sm:$0xf]
    %v1660 = vld [vmem:[%s11 + $0x24] sm:$0xf]
    %v1661 = vld [vmem:[%s11 + $0x28] sm:$0xf]
    %v1662 = vld [vmem:[%s11 + $0x2c] sm:$0xf]
    %v1663 = vld [vmem:[%s11 + $0x30] sm:$0xf]
    %v1664 = vld [vmem:[%s11 + $0x34] sm:$0xf]
    %v1665 = vld [vmem:[%s11 + $0x38] sm:$0xf]
    %v1666 = vld [vmem:[%s11 + $0x3c] sm:$0xf]
    %v1667 = vld [vmem:[%s11 + $0x40] sm:$0xf]
    %v1668 = vld [vmem:[%s11 + $0x44] sm:$0xf]
    %v1669 = vld [vmem:[%s11 + $0x48] sm:$0xf]
    %v1670 = vld [vmem:[%s11 + $0x4c] sm:$0xf]
    %v1671 = vld [vmem:[%s11 + $0x50] sm:$0xf]
    %v1672 = vld [vmem:[%s11 + $0x54] sm:$0xf]
    %v1673 = vld [vmem:[%s11 + $0x58] sm:$0xf]
    %v1674 = vld [vmem:[%s11 + $0x5c] sm:$0xf]
    %v1675 = vld [vmem:[%s11 + $0x60] sm:$0xf]
    %v1676 = vld [vmem:[%s11 + $0x64] sm:$0xf]
    %v1677 = vld [vmem:[%s11 + $0x68] sm:$0xf]
    %v1678 = vld [vmem:[%s11 + $0x6c] sm:$0xf]
    %v1679 = vld [vmem:[%s11 + $0x70] sm:$0xf]
    %v1680 = vld [vmem:[%s11 + $0x74] sm:$0xf]
    %v1681 = vld [vmem:[%s11 + $0x78] sm:$0xf]
    %v1682 = vld [vmem:[%s11 + $0x7c] sm:$0xf]
    %v1683 = vld [vmem:[%s12] sm:$0x1]
    %v1685 = vlaneseq
    %v1686 = vshrl.u32 %v1685, 7
    %v1687 = vsub.s32 0, %v1686
    %v1688 = vrot.slane %v1683, %v1687
    %v1722 = vunpack.c.l.b16 %v1651
    %v1723 = vunpack.c.l.b16 %v1652
    %v1724 = vunpack.c.l.b16 %v1653
    %v1725 = vunpack.c.l.b16 %v1654
    %v1726 = vunpack.c.l.b16 %v1655
    %v1727 = vunpack.c.l.b16 %v1656
    %v1728 = vunpack.c.l.b16 %v1657
    %v1729 = vunpack.c.l.b16 %v1658
    %v1730 = vunpack.c.l.b16 %v1659
    %v1731 = vunpack.c.l.b16 %v1660
    %v1732 = vunpack.c.l.b16 %v1661
    %v1733 = vunpack.c.l.b16 %v1662
    %v1734 = vunpack.c.l.b16 %v1663
    %v1735 = vunpack.c.l.b16 %v1664
    %v1736 = vunpack.c.l.b16 %v1665
    %v1737 = vunpack.c.l.b16 %v1666
    %v1738 = vunpack.c.l.b16 %v1667
    %v1739 = vunpack.c.l.b16 %v1668
    %v1740 = vunpack.c.l.b16 %v1669
    %v1741 = vunpack.c.l.b16 %v1670
    %v1742 = vunpack.c.l.b16 %v1671
    %v1743 = vunpack.c.l.b16 %v1672
    %v1744 = vunpack.c.l.b16 %v1673
    %v1745 = vunpack.c.l.b16 %v1674
    %v1746 = vunpack.c.l.b16 %v1675
    %v1747 = vunpack.c.l.b16 %v1676
    %v1748 = vunpack.c.l.b16 %v1677
    %v1749 = vunpack.c.l.b16 %v1678
    %v1750 = vunpack.c.l.b16 %v1679
    %v1751 = vunpack.c.l.b16 %v1680
    %v1752 = vunpack.c.l.b16 %v1681
    %v1753 = vunpack.c.l.b16 %v1682
    %v1754 = vpack.c.b16 %v1723, %v1722
    %v1755 = vpack.c.b16 %v1725, %v1724
    %v1756 = vpack.c.b16 %v1727, %v1726
    %v1757 = vpack.c.b16 %v1729, %v1728
    %v1758 = vpack.c.b16 %v1731, %v1730
    %v1759 = vpack.c.b16 %v1733, %v1732
    %v1760 = vpack.c.b16 %v1735, %v1734
    %v1761 = vpack.c.b16 %v1737, %v1736
    %v1762 = vpack.c.b16 %v1739, %v1738
    %v1763 = vpack.c.b16 %v1741, %v1740
    %v1764 = vpack.c.b16 %v1743, %v1742
    %v1765 = vpack.c.b16 %v1745, %v1744
    %v1766 = vpack.c.b16 %v1747, %v1746
    %v1767 = vpack.c.b16 %v1749, %v1748
    %v1768 = vpack.c.b16 %v1751, %v1750
    %v1769 = vpack.c.b16 %v1753, %v1752
    %1786 = vmatprep.subr.bf16.mxu0 0
    %1787 = vmatpush1.bf16.msra.mxu0 %v1754
    %1788 = vmatprep.subr.bf16.mxu0 0
    %1789 = vmatpush1.bf16.msra.mxu0 %v1755
    %1790 = vmatprep.subr.bf16.mxu0 0
    %1791 = vmatpush1.bf16.msra.mxu0 %v1756
    %1792 = vmatprep.subr.bf16.mxu0 0
    %1793 = vmatpush1.bf16.msra.mxu0 %v1757
    %1794 = vmatprep.subr.bf16.mxu0 0
    %1795 = vmatpush1.bf16.msra.mxu0 %v1758
    %1796 = vmatprep.subr.bf16.mxu0 0
    %1797 = vmatpush1.bf16.msra.mxu0 %v1759
    %1798 = vmatprep.subr.bf16.mxu0 0
    %1799 = vmatpush1.bf16.msra.mxu0 %v1760
    %1800 = vmatprep.subr.bf16.mxu0 0
    %1801 = vmatpush1.bf16.msra.mxu0 %v1761
    %1802 = vmatprep.subr.bf16.mxu0 0
    %1803 = vmatpush1.bf16.msra.mxu0 %v1762
    %1804 = vmatprep.subr.bf16.mxu0 0
    %1805 = vmatpush1.bf16.msra.mxu0 %v1763
    %1806 = vmatprep.subr.bf16.mxu0 0
    %1807 = vmatpush1.bf16.msra.mxu0 %v1764
    %1808 = vmatprep.subr.bf16.mxu0 0
    %1809 = vmatpush1.bf16.msra.mxu0 %v1765
    %1810 = vmatprep.subr.bf16.mxu0 0
    %1811 = vmatpush1.bf16.msra.mxu0 %v1766
    %1812 = vmatprep.subr.bf16.mxu0 0
    %1813 = vmatpush1.bf16.msra.mxu0 %v1767
    %1814 = vmatprep.subr.bf16.mxu0 0
    %1815 = vmatpush1.bf16.msra.mxu0 %v1768
    %1816 = vmatprep.subr.bf16.mxu0 0
    %1817 = vmatpush1.bf16.msra.mxu0 %v1769
    %1818 = vmatprep.mubr.bf16.mxu0 %v1650
    %1819 = vmatmul.mubr.bf16.gmra.mrb[0].mxu0 %v1649
    %v1820 = vpop.f32.mrb[0].mxu0
    %v1821 = vadd.f32 %v1688, %v1820
    %v1822 = vpop.f32.mrb[0].mxu0
    %v1823 = vpop.f32.mrb[0].mxu0
    %v1824 = vpop.f32.mrb[0].mxu0
    %1825 = vdwg.mxu0
    %v1826 = vmax.f32 %v1821, 0.0
    %v1827 = vpack.c.bf16 %v1826, %v1826
    %v1828 = vld [vmem:[%s13] sm:$0xf]
    %v1829 = vld [vmem:[%s13 + $0x4] sm:$0xf]
    %v1830 = vld [vmem:[%s13 + $0x8] sm:$0xf]
    %v1831 = vld [vmem:[%s13 + $0xc] sm:$0xf]
    %v1832 = vld [vmem:[%s13 + $0x10] sm:$0xf]
    %v1833 = vld [vmem:[%s13 + $0x14] sm:$0xf]
    %v1834 = vld [vmem:[%s13 + $0x18] sm:$0xf]
    %v1835 = vld [vmem:[%s13 + $0x1c] sm:$0xf]
    %v1836 = vld [vmem:[%s13 + $0x20] sm:$0xf]
    %v1837 = vld [vmem:[%s13 + $0x24] sm:$0xf]
    %v1838 = vld [vmem:[%s13 + $0x28] sm:$0xf]
    %v1839 = vld [vmem:[%s13 + $0x2c] sm:$0xf]
    %v1840 = vld [vmem:[%s13 + $0x30] sm:$0xf]
    %v1841 = vld [vmem:[%s13 + $0x34] sm:$0xf]
    %v1842 = vld [vmem:[%s13 + $0x38] sm:$0xf]
    %v1843 = vld [vmem:[%s13 + $0x3c] sm:$0xf]
    %v1844 = vld [vmem:[%s14] sm:$0x1]
    %v1846 = vlaneseq
    %v1847 = vshrl.u32 %v1846, 7
    %v1848 = vsub.s32 0, %v1847
    %v1849 = vrot.slane %v1844, %v1848
    %v1867 = vunpack.c.l.b16 %v1828
    %v1868 = vunpack.c.l.b16 %v1829
    %v1869 = vunpack.c.l.b16 %v1830
    %v1870 = vunpack.c.l.b16 %v1831
    %v1871 = vunpack.c.l.b16 %v1832
    %v1872 = vunpack.c.l.b16 %v1833
    %v1873 = vunpack.c.l.b16 %v1834
    %v1874 = vunpack.c.l.b16 %v1835
    %v1875 = vunpack.c.l.b16 %v1836
    %v1876 = vunpack.c.l.b16 %v1837
    %v1877 = vunpack.c.l.b16 %v1838
    %v1878 = vunpack.c.l.b16 %v1839
    %v1879 = vunpack.c.l.b16 %v1840
    %v1880 = vunpack.c.l.b16 %v1841
    %v1881 = vunpack.c.l.b16 %v1842
    %v1882 = vunpack.c.l.b16 %v1843
    %v1883 = vpack.c.b16 %v1868, %v1867
    %v1884 = vpack.c.b16 %v1870, %v1869
    %v1885 = vpack.c.b16 %v1872, %v1871
    %v1886 = vpack.c.b16 %v1874, %v1873
    %v1887 = vpack.c.b16 %v1876, %v1875
    %v1888 = vpack.c.b16 %v1878, %v1877
    %v1889 = vpack.c.b16 %v1880, %v1879
    %v1890 = vpack.c.b16 %v1882, %v1881
    %1899 = vmatprep.subr.bf16.mxu0 0
    %1900 = vmatpush1.bf16.msra.mxu0 %v1883
    %1901 = vmatprep.subr.bf16.mxu0 0
    %1902 = vmatpush1.bf16.msra.mxu0 %v1884
    %1903 = vmatprep.subr.bf16.mxu0 0
    %1904 = vmatpush1.bf16.msra.mxu0 %v1885
    %1905 = vmatprep.subr.bf16.mxu0 0
    %1906 = vmatpush1.bf16.msra.mxu0 %v1886
    %1907 = vmatprep.subr.bf16.mxu0 0
    %1908 = vmatpush1.bf16.msra.mxu0 %v1887
    %1909 = vmatprep.subr.bf16.mxu0 0
    %1910 = vmatpush1.bf16.msra.mxu0 %v1888
    %1911 = vmatprep.subr.bf16.mxu0 0
    %1912 = vmatpush1.bf16.msra.mxu0 %v1889
    %1913 = vmatprep.subr.bf16.mxu0 0
    %1914 = vmatpush1.bf16.msra.mxu0 %v1890
    %1915 = vmatprep.subr.bf16.mxu0 0
    %1916 = vmatpush1.bf16.msra.mxu0 0
    %1917 = vmatprep.subr.bf16.mxu0 0
    %1918 = vmatpush1.bf16.msra.mxu0 0
    %1919 = vmatprep.subr.bf16.mxu0 0
    %1920 = vmatpush1.bf16.msra.mxu0 0
    %1921 = vmatprep.subr.bf16.mxu0 0
    %1922 = vmatpush1.bf16.msra.mxu0 0
    %1923 = vmatprep.subr.bf16.mxu0 0
    %1924 = vmatpush1.bf16.msra.mxu0 0
    %1925 = vmatprep.subr.bf16.mxu0 0
    %1926 = vmatpush1.bf16.msra.mxu0 0
    %1927 = vmatprep.subr.bf16.mxu0 0
    %1928 = vmatpush1.bf16.msra.mxu0 0
    %1929 = vmatprep.subr.bf16.mxu0 0
    %1930 = vmatpush1.bf16.msra.mxu0 0
    %1931 = vmatprep.mubr.bf16.mxu0 0
    %1932 = vmatmul.mubr.bf16.gmra.mrb[0].mxu0 %v1827
    %v1933 = vpop.f32.mrb[0].mxu0
    %v1934 = vadd.f32 %v1849, %v1933
    %v1935 = vpop.f32.mrb[0].mxu0
    %v1936 = vpop.f32.mrb[0].mxu0
    %v1937 = vpop.f32.mrb[0].mxu0
    %1938 = vdwg.mxu0
    %v1939 = vmax.f32 %v1934, 0.0
    %v1940 = vld [vmem:[%s15] sm:$0x1]
    %v1942 = vlaneseq
    %v1943 = vshrl.u32 %v1942, 7
    %v1944 = vsub.s32 0, %v1943
    %v1945 = vrot.slane %v1940, %v1944
    %v1947 = vmul.f32 %v1648, %v1945
    %v1948 = vld [vmem:[%s16] sm:$0x1]
    %v1950 = vlaneseq
    %v1951 = vshrl.u32 %v1950, 7
    %v1952 = vsub.s32 0, %v1951
    %v1953 = vrot.slane %v1948, %v1952
    %v1955 = vmul.f32 %v1939, %v1953
    %v1956 = vadd.f32 %v1947, %v1955
    %vm1957 = vcmask 523264
    %v1958 = vsel %vm1957, %v1956, 0.0
    %1959 = vadd.xlane.f32.xlu0 %v1958
    %v1960 = vpop.xlane.xlu0 %1959
    %v1961 = vld [vmem:[#allocation2] sm:$0x1]
    %v1963 = vlaneseq
    %v1964 = vshrl.u32 %v1963, 7
    %v1965 = vsub.s32 0, %v1964
    %v1966 = vrot.slane %v1961, %v1965
    %v1968 = vadd.f32 %v1960, %v1966
    %v1969 = vxor.u32 %v1968, 2147483648
    %v1970 = vmul.f32 %v1969, 1.442695
    %v1971 = vpow.pop %v1970
    %v1972 = vadd.f32 %v1971, 1.0
    %v1973 = vrcp.pop %v1972
    %v1974 = vmul.f32 1.0, %v1973
    %vm1975 = vcmask 7168
    %1976 = vst.msk [vmem:[%s18] sm:$0xff] %vm1975, %v1974
    // Predicated region
    $region82: #{tpu_custom_call.1} parent=1 // pred_check
      _
    $region83: #{tpu_custom_call.1} parent=1 // pred_check_branch
      %1978 = sbr.rel (0) target = $region85
    $region84: #{tpu_custom_call.1} parent=1 // pred_region
      _
    $region85: #{tpu_custom_call.1} parent=1 // pred_fallthru
      _
    // Predicated region
    $region86: #{tpu_custom_call.1} parent=1 // pred_check
      _
    $region87: #{tpu_custom_call.1} parent=1 // pred_check_branch
      %1980 = sbr.rel (0) target = $region89
    $region88: #{tpu_custom_call.1} parent=1 // pred_region
      _
    $region89: #{tpu_custom_call.1} parent=1 // pred_fallthru
      _
    %1981 = vsyncpa [#allocation4], 1
    %1982 = vsyncpa [#allocation6], 1

</llo_original>
